<compile_context>
chip_gen: v7x
topology: tpu7x:2x2x1
jax: 0.10.0
libtpu: 0.0.40
codegen_flags: <defaults>
</compile_context>

<pallas_src>
import functools

import jax
import jax.numpy as jnp
from jax import lax
from jax.experimental import pallas as pl
from jax.experimental.pallas import tpu as pltpu

HIDDEN = 1024
NUM_LAYERS = 4
LANE = 128
SUBLANE = 8
VMEM_LIMIT = 48 * 1024 * 1024     # <= 64 MiB so it is satisfiable on v7x


def _round_up(n, m):
    return ((n + m - 1) // m) * m


def _row_tile(n, cap=256):
    """Largest tile <= cap (power-of-two, >= 8) dividing n; n is a multiple of 8."""
    t = cap
    while t > SUBLANE and n % t != 0:
        t //= 2
    return t if n % t == 0 else n


def _time_chunk(t_total, cap=16):
    tc = min(t_total, cap)
    while t_total % tc != 0:
        tc -= 1
    return tc


# ----------------------------------------------------------------------------
# Hoisted input projection: gates_in = x @ W_ih^T + (b_ih + b_hh), row-tiled
# ----------------------------------------------------------------------------
def _proj_kernel(x_ref, w_ref, b_ref, o_ref):
    o_ref[...] = (jnp.dot(x_ref[...].astype(jnp.bfloat16), w_ref[...],
                          preferred_element_type=jnp.float32)
                  + b_ref[...])


def input_projection(x, w_bf16, bias):
    """x: (R, IN) f32, w: (IN, OUT) bf16, bias: (1, OUT) f32 -> (R, OUT) f32."""
    R, IN = x.shape
    OUT = w_bf16.shape[1]
    tr = _row_tile(R)
    return pl.pallas_call(
        _proj_kernel,
        out_shape=jax.ShapeDtypeStruct((R, OUT), jnp.float32),
        grid=(R // tr,),
        in_specs=[
            pl.BlockSpec((tr, IN), lambda r: (r, 0)),
            pl.BlockSpec((IN, OUT), lambda r: (0, 0),
                         pipeline_mode=pl.Buffered(1)),
            pl.BlockSpec((1, OUT), lambda r: (0, 0),
                         pipeline_mode=pl.Buffered(1)),
        ],
        out_specs=pl.BlockSpec((tr, OUT), lambda r: (r, 0)),
        compiler_params=pltpu.CompilerParams(
            dimension_semantics=("parallel",),
            vmem_limit_bytes=VMEM_LIMIT),
    )(x, w_bf16, bias)


# ----------------------------------------------------------------------------
# LSTM recurrence: grid over time chunks, in-kernel fori_loop over the chunk,
# h/c carried in resident output blocks; only h @ W_hh hits the MXU per step.
# ----------------------------------------------------------------------------
def _lstm_recurrent_kernel(gin_ref, whh_ref, h0_ref, c0_ref,
                           y_ref, h_ref, c_ref, *, t_chunk):
    @pl.when(pl.program_id(0) == 0)
    def _():
        h_ref[...] = h0_ref[...]
        c_ref[...] = c0_ref[...]

    def step(t, carry):
        h = h_ref[...]                                    # (Bp, H) f32
        gates = gin_ref[t] + jnp.dot(h.astype(jnp.bfloat16), whh_ref[...],
                                     preferred_element_type=jnp.float32)
        i = jax.nn.sigmoid(gates[:, 0:HIDDEN])
        f = jax.nn.sigmoid(gates[:, HIDDEN:2 * HIDDEN])
        g = jnp.tanh(gates[:, 2 * HIDDEN:3 * HIDDEN])
        o = jax.nn.sigmoid(gates[:, 3 * HIDDEN:4 * HIDDEN])
        c_new = f * c_ref[...] + i * g
        h_new = o * jnp.tanh(c_new)
        c_ref[...] = c_new
        h_ref[...] = h_new
        y_ref[t] = h_new
        return carry

    lax.fori_loop(0, t_chunk, step, 0, unroll=True)


def lstm_layer(gates_in, whh_bf16, h0, c0, t_chunk):
    """gates_in: (T, Bp, 4H) f32. Returns (y (T,Bp,H), h_T (Bp,H), c_T (Bp,H))."""
    T, Bp, G = gates_in.shape
    H = HIDDEN
    kernel = functools.partial(_lstm_recurrent_kernel, t_chunk=t_chunk)
    return pl.pallas_call(
        kernel,
        out_shape=(jax.ShapeDtypeStruct((T, Bp, H), jnp.float32),
                   jax.ShapeDtypeStruct((Bp, H), jnp.float32),
                   jax.ShapeDtypeStruct((Bp, H), jnp.float32)),
        grid=(T // t_chunk,),
        in_specs=[
            pl.BlockSpec((t_chunk, Bp, G), lambda s: (s, 0, 0)),
            pl.BlockSpec((H, G), lambda s: (0, 0),
                         pipeline_mode=pl.Buffered(1)),
            pl.BlockSpec((Bp, H), lambda s: (0, 0),
                         pipeline_mode=pl.Buffered(1)),
            pl.BlockSpec((Bp, H), lambda s: (0, 0),
                         pipeline_mode=pl.Buffered(1)),
        ],
        out_specs=(
            pl.BlockSpec((t_chunk, Bp, H), lambda s: (s, 0, 0)),
            pl.BlockSpec((Bp, H), lambda s: (0, 0)),
            pl.BlockSpec((Bp, H), lambda s: (0, 0)),
        ),
        compiler_params=pltpu.CompilerParams(
            dimension_semantics=("arbitrary",),
            vmem_limit_bytes=VMEM_LIMIT),
    )(gates_in, whh_bf16, h0, c0)


# ----------------------------------------------------------------------------
# Fused MLP head: 3x (Linear + Tanh) + final Linear, row-tiled (parallel axis)
# ----------------------------------------------------------------------------
def _mlp_kernel(x_ref, w1, b1, w2, b2, w3, b3, w4, b4, o_ref):
    h = jnp.tanh(jnp.dot(x_ref[...].astype(jnp.bfloat16), w1[...],
                         preferred_element_type=jnp.float32) + b1[...])
    h = jnp.tanh(jnp.dot(h.astype(jnp.bfloat16), w2[...],
                         preferred_element_type=jnp.float32) + b2[...])
    h = jnp.tanh(jnp.dot(h.astype(jnp.bfloat16), w3[...],
                         preferred_element_type=jnp.float32) + b3[...])
    o_ref[...] = jnp.dot(h.astype(jnp.bfloat16), w4[...],
                         preferred_element_type=jnp.float32) + b4[...]


def mlp_head(x, mlp):
    R, H = x.shape
    tokens = mlp['w4'].shape[1]
    tr = _row_tile(R)

    def wspec(shape):
        return pl.BlockSpec(shape, lambda r: (0, 0),
                            pipeline_mode=pl.Buffered(1))

    return pl.pallas_call(
        _mlp_kernel,
        out_shape=jax.ShapeDtypeStruct((R, tokens), jnp.float32),
        grid=(R // tr,),
        in_specs=[
            pl.BlockSpec((tr, H), lambda r: (r, 0)),
            wspec((H, 2048)), wspec((1, 2048)),
            wspec((2048, 1024)), wspec((1, 1024)),
            wspec((1024, 512)), wspec((1, 512)),
            wspec((512, tokens)), wspec((1, tokens)),
        ],
        out_specs=pl.BlockSpec((tr, tokens), lambda r: (r, 0)),
        compiler_params=pltpu.CompilerParams(
            dimension_semantics=("parallel",),
            vmem_limit_bytes=VMEM_LIMIT),
    )(x, mlp['w1'], mlp['b1'], mlp['w2'], mlp['b2'],
      mlp['w3'], mlp['b3'], mlp['w4'], mlp['b4'])


# ----------------------------------------------------------------------------
# Parameter init (PyTorch-like shapes; weights stored bf16, pre-transposed)
# ----------------------------------------------------------------------------
def init_params(key, tokens, emb_dim, padding_index):
    keys = iter(jax.random.split(key, 64))

    def unif(shape, scale):
        return jax.random.uniform(next(keys), shape, jnp.float32, -scale, scale)

    emb_pad = _round_up(emb_dim, LANE)                 # lane-dense layer-0 input
    emb = jax.random.normal(next(keys), (tokens, emb_dim), jnp.float32)
    emb = emb.at[padding_index].set(0.0)               # padding_idx row is zero
    emb = jnp.pad(emb, ((0, 0), (0, emb_pad - emb_dim)))

    lstm = []
    for layer in range(NUM_LAYERS):
        in_dim = emb_dim if layer == 0 else HIDDEN
        in_pad = emb_pad if layer == 0 else HIDDEN
        k = 1.0 / jnp.sqrt(HIDDEN)
        wih_t = unif((in_dim, 4 * HIDDEN), k)           # == W_ih.T
        wih_t = jnp.pad(wih_t, ((0, in_pad - in_dim), (0, 0)))
        whh_t = unif((HIDDEN, 4 * HIDDEN), k)           # == W_hh.T
        bias = (unif((4 * HIDDEN,), k) + unif((4 * HIDDEN,), k)).reshape(1, -1)
        lstm.append({'wih_t': wih_t.astype(jnp.bfloat16),
                     'whh_t': whh_t.astype(jnp.bfloat16),
                     'bias': bias})

    def linear(fan_in, fan_out):
        k = 1.0 / jnp.sqrt(fan_in)
        return unif((fan_in, fan_out), k).astype(jnp.bfloat16), unif((1, fan_out), k)

    w1, b1 = linear(1024, 2048)
    w2, b2 = linear(2048, 1024)
    w3, b3 = linear(1024, 512)
    w4, b4 = linear(512, tokens)
    mlp = {'w1': w1, 'b1': b1, 'w2': w2, 'b2': b2,
           'w3': w3, 'b3': b3, 'w4': w4, 'b4': b4}
    return {'embedding': emb, 'lstm': lstm, 'mlp': mlp}


# ----------------------------------------------------------------------------
# Full forward: Embedding -> 4x LSTM -> fused MLP head
# ----------------------------------------------------------------------------
def model_forward(token_ids, params, hidden=None):
    B, T = token_ids.shape
    Bp = _round_up(B, SUBLANE)                          # pad batch to sublanes
    t_chunk = _time_chunk(T)

    # Embedding lookup: data-dependent row gather, done as plain-JAX glue.
    emb = jnp.take(params['embedding'], token_ids, axis=0)      # (B, T, Epad)
    x = jnp.transpose(emb, (1, 0, 2)).astype(jnp.float32)        # (T, B, Epad)
    x = jnp.pad(x, ((0, 0), (0, Bp - B), (0, 0)))                # (T, Bp, Epad)

    if hidden is None:
        h0 = jnp.zeros((NUM_LAYERS, Bp, HIDDEN), jnp.float32)
        c0 = jnp.zeros((NUM_LAYERS, Bp, HIDDEN), jnp.float32)
    else:
        h0, c0 = hidden
        h0 = jnp.pad(h0.astype(jnp.float32), ((0, 0), (0, Bp - B), (0, 0)))
        c0 = jnp.pad(c0.astype(jnp.float32), ((0, 0), (0, Bp - B), (0, 0)))

    # TODO(synk): on v7x with Bp >= 16, split the batch across the two
    # TensorCores (leading parallel grid axis) for the recurrent kernel.
    hs, cs = [], []
    for layer in range(NUM_LAYERS):
        lp = params['lstm'][layer]
        in_dim = x.shape[-1]
        gates_in = input_projection(x.reshape(T * Bp, in_dim),
                                    lp['wih_t'], lp['bias'])
        gates_in = gates_in.reshape(T, Bp, 4 * HIDDEN)
        x, h_f, c_f = lstm_layer(gates_in, lp['whh_t'],
                                 h0[layer], c0[layer], t_chunk)
        hs.append(h_f[:B])
        cs.append(c_f[:B])

    flat = x.reshape(T * Bp, HIDDEN)
    logits = mlp_head(flat, params['mlp'])                        # (T*Bp, V)
    logits = logits.reshape(T, Bp, -1)[:, :B].transpose(1, 0, 2)  # (B, T, V)
    return logits, (jnp.stack(hs), jnp.stack(cs))


# ----------------------------------------------------------------------------
# Pure-JAX reference with matching (bf16-weight, f32-accumulate) numerics
# ----------------------------------------------------------------------------
def ref_forward(token_ids, params):
    B, T = token_ids.shape
    x = jnp.take(params['embedding'], token_ids, axis=0)         # (B, T, Epad)
    for layer in range(NUM_LAYERS):
        lp = params['lstm'][layer]
        gates_in = (jnp.dot(x.astype(jnp.bfloat16), lp['wih_t'],
                            preferred_element_type=jnp.float32) + lp['bias'])
        h = jnp.zeros((B, HIDDEN), jnp.float32)
        c = jnp.zeros((B, HIDDEN), jnp.float32)
        ys = []
        for t in range(T):
            gates = gates_in[:, t] + jnp.dot(
                h.astype(jnp.bfloat16), lp['whh_t'],
                preferred_element_type=jnp.float32)
            i = jax.nn.sigmoid(gates[:, :HIDDEN])
            f = jax.nn.sigmoid(gates[:, HIDDEN:2 * HIDDEN])
            g = jnp.tanh(gates[:, 2 * HIDDEN:3 * HIDDEN])
            o = jax.nn.sigmoid(gates[:, 3 * HIDDEN:])
            c = f * c + i * g
            h = o * jnp.tanh(c)
            ys.append(h)
        x = jnp.stack(ys, axis=1)                                 # (B, T, H)
    m = params['mlp']
    flat = x.reshape(B * T, HIDDEN)
    h1 = jnp.tanh(jnp.dot(flat.astype(jnp.bfloat16), m['w1'],
                          preferred_element_type=jnp.float32) + m['b1'])
    h2 = jnp.tanh(jnp.dot(h1.astype(jnp.bfloat16), m['w2'],
                          preferred_element_type=jnp.float32) + m['b2'])
    h3 = jnp.tanh(jnp.dot(h2.astype(jnp.bfloat16), m['w3'],
                          preferred_element_type=jnp.float32) + m['b3'])
    logits = jnp.dot(h3.astype(jnp.bfloat16), m['w4'],
                     preferred_element_type=jnp.float32) + m['b4']
    return logits.reshape(B, T, -1)


# TODO(synk): fit/predict/forward_feed host-side loops (CrossEntropyLoss,
# argmax decode) are training/inference drivers, not part of the forward pass.

if __name__ == "__main__":
    TOKENS = 128
    PADDING_INDEX = 0
    EMB_DIM = 8
    B, T = 2, 8

    key = jax.random.PRNGKey(0)
    k_inp, k_par = jax.random.split(key)
    token_ids = jax.random.randint(k_inp, (B, T), 0, TOKENS, dtype=jnp.int32)
    params = init_params(k_par, TOKENS, EMB_DIM, PADDING_INDEX)

    logits, (h_n, c_n) = model_forward(token_ids, params, hidden=None)
    logits = jax.block_until_ready(logits)
    h_n = jax.block_until_ready(h_n)
    c_n = jax.block_until_ready(c_n)

    assert logits.shape == (B, T, TOKENS)
    assert h_n.shape == (NUM_LAYERS, B, HIDDEN)
    assert c_n.shape == (NUM_LAYERS, B, HIDDEN)

    ref = jax.block_until_ready(ref_forward(token_ids, params))
    max_err = float(jnp.max(jnp.abs(logits - ref)))
    assert jnp.allclose(logits, ref, atol=2e-2, rtol=2e-2), max_err

    print("KERNEL_OK")
</pallas_src>

<mosaic_0001>
module attributes {stable_mosaic.version = 11 : i64} {
  func.func @_proj_kernel(%arg0: i32, %arg1: memref<64x128xf32, #tpu.memory_space<vmem>>, %arg2: memref<128x4096xbf16, #tpu.memory_space<vmem>>, %arg3: memref<1x4096xf32, #tpu.memory_space<vmem>>, %arg4: memref<64x4096xf32, #tpu.memory_space<vmem>>) attributes {dimension_semantics = [#tpu.dimension_semantics<parallel>], iteration_bounds = array<i64: 1>, scalar_prefetch = 0 : i64, scratch_operands = 0 : i64, tpu.core_type = #tpu.core_type<tc>, window_params = [{transform_indices = @transform_0, window_bounds = array<i64: 64, 128>}, {pipeline_mode = #tpu.pipeline_mode<synchronous>, transform_indices = @transform_1, window_bounds = array<i64: 128, 4096>}, {pipeline_mode = #tpu.pipeline_mode<synchronous>, transform_indices = @transform_2, window_bounds = array<i64: 1, 4096>}, {transform_indices = @transform_3, window_bounds = array<i64: 64, 4096>}]} {
    %c0 = arith.constant 0 : index
    %c0_0 = arith.constant 0 : index
    %0 = vector.load %arg1[%c0, %c0_0] : memref<64x128xf32, #tpu.memory_space<vmem>>, vector<64x128xf32>
    %1 = arith.truncf %0 : vector<64x128xf32> to vector<64x128xbf16>
    %c0_1 = arith.constant 0 : index
    %c0_2 = arith.constant 0 : index
    %2 = vector.load %arg2[%c0_1, %c0_2] : memref<128x4096xbf16, #tpu.memory_space<vmem>>, vector<128x4096xbf16>
    %cst = arith.constant dense<0.000000e+00> : vector<64x4096xf32>
    %3 = tpu.matmul %1, %2, %cst {dimension_numbers = #tpu.dot_dimension_numbers<[1], [0], [0], [1], [0, 0, 1, 1], [], []>} : vector<64x128xbf16>, vector<128x4096xbf16>, vector<64x4096xf32> -> vector<64x4096xf32>
    %c0_3 = arith.constant 0 : index
    %c0_4 = arith.constant 0 : index
    %4 = vector.load %arg3[%c0_3, %c0_4] : memref<1x4096xf32, #tpu.memory_space<vmem>>, vector<1x4096xf32>
    %5 = vector.broadcast %4 : vector<1x4096xf32> to vector<64x4096xf32>
    %6 = arith.addf %3, %5 : vector<64x4096xf32>
    %c0_5 = arith.constant 0 : index
    %c0_6 = arith.constant 0 : index
    %7 = vector.load %arg4[%c0_5, %c0_6] : memref<64x4096xf32, #tpu.memory_space<vmem>>, vector<64x4096xf32>
    tpu.vector_store %arg4[%c0_5, %c0_6], %6 {strides = array<i32>} : memref<64x4096xf32, #tpu.memory_space<vmem>>, vector<64x4096xf32>,
    return
  }
  func.func @transform_0(%arg0: i32) -> (i32, i32) {
    %c0_i32 = arith.constant 0 : i32
    %c0_i32_0 = arith.constant 0 : i32
    return %arg0, %c0_i32 : i32, i32
  }
  func.func @transform_1(%arg0: i32) -> (i32, i32) {
    %c0_i32 = arith.constant 0 : i32
    %c0_i32_0 = arith.constant 0 : i32
    %c0_i32_1 = arith.constant 0 : i32
    return %c0_i32, %c0_i32_0 : i32, i32
  }
  func.func @transform_2(%arg0: i32) -> (i32, i32) {
    %c0_i32 = arith.constant 0 : i32
    %c0_i32_0 = arith.constant 0 : i32
    %c0_i32_1 = arith.constant 0 : i32
    return %c0_i32, %c0_i32_0 : i32, i32
  }
  func.func @transform_3(%arg0: i32) -> (i32, i32) {
    %c0_i32 = arith.constant 0 : i32
    %c0_i32_0 = arith.constant 0 : i32
    return %arg0, %c0_i32 : i32, i32
  }
}

</mosaic_0001>

<llo_original>
// kernel: tpu_custom_call.1
$region0: #{tpu_custom_call.1}
  #allocation0 [shape = 'u32[]', space=smem, size = 0x4, offset = 0x4, fixed_abs, tag = 'smem constant byte address 0x4 - core index']
  #allocation1 [shape = 'u32[144,128]{1,0:T(1,128)}', space=vmem, size = 0x12000, scoped, tag = 'internal scratch']
  %s0 = inlined_call_operand.hbm [shape: f32[64,128], index: 0, kind: input, shape index: {}]
  %s1 = inlined_call_operand.hbm [shape: bf16[128,4096], index: 1, kind: input, shape index: {}]
  %s2 = inlined_call_operand.hbm [shape: f32[1,4096], index: 2, kind: input, shape index: {}]
  %s3 = inlined_call_operand.hbm [shape: f32[64,4096], index: 3, kind: output, shape index: {}]
  %s4 = sld [smem:[#allocation0]]
  $region34: #{tpu_custom_call.1} parent=0
    _
  %s6 = ssub.s32 1, %s4
  %s7 = scalar_select 0, %s6, %s4
  $region1: #{tpu_custom_call.1} parent=0
    #allocation2 [shape = 'u8[32768]{0}', space=vmem, size = 0x8000, scoped, tag = 'input window, operand 0, single buffered']
    #allocation3 [shape = 's32[1]{0}', space=sflag, size = 0x4, scoped, tag = 'scoped memory for tpu_custom_call.1']
    #allocation4 [shape = 's32[1]{0}', space=sflag, size = 0x4, scoped, tag = 'scoped memory for tpu_custom_call.1']
    #allocation5 [shape = 'u8[1048576]{0}', space=vmem, size = 0x100000, scoped, tag = 'input window, operand 1, single buffered']
    #allocation6 [shape = 's32[1]{0}', space=sflag, size = 0x4, scoped, tag = 'scoped memory for tpu_custom_call.1']
    #allocation7 [shape = 'u8[16384]{0}', space=vmem, size = 0x4000, scoped, tag = 'input window, operand 2, single buffered']
    #allocation8 [shape = 'u8[1048576]{0}', space=vmem, size = 0x100000, scoped, tag = 'output window, operand 0, single buffered']
    %8 = vsyncpa [#allocation3], 0
    %9 = vsyncpa [#allocation6], 0
    %10 = vsyncpa [#allocation4], 0
    // Predicated region
    $region2: #{tpu_custom_call.1} parent=1 // pred_check
      _
    $region3: #{tpu_custom_call.1} parent=1 // pred_check_branch
      %12 = sbr.rel (0) target = $region5
    $region4: #{tpu_custom_call.1} parent=1 // pred_region
      %s14 = ssub.s32 1024, 1024
      %15 = vsyncadd [#allocation3], %s14
      %s16 = sshll.u32 [#allocation2], 4
      %s17 = int_to_ptr.vmem [resolvable:$true] %s16
      %22 = dma.hbm_to_vmem [thread:$0]  %s0, 1024, %s17, [#allocation3], 128, 128, 8
    $region5: #{tpu_custom_call.1} parent=1 // pred_fallthru
      _
    // Predicated region
    $region6: #{tpu_custom_call.1} parent=1 // pred_check
      _
    $region7: #{tpu_custom_call.1} parent=1 // pred_check_branch
      %24 = sbr.rel (0) target = $region9
    $region8: #{tpu_custom_call.1} parent=1 // pred_region
      %s26 = ssub.s32 32768, 32768
      %27 = vsyncadd [#allocation6], %s26
      %s28 = sshll.u32 [#allocation5], 4
      %s29 = int_to_ptr.vmem [resolvable:$true] %s28
      %34 = dma.hbm_to_vmem [thread:$0]  %s1, 32768, %s29, [#allocation6], 2048, 2048, 128
    $region9: #{tpu_custom_call.1} parent=1 // pred_fallthru
      _
    // Predicated region
    $region10: #{tpu_custom_call.1} parent=1 // pred_check
      _
    $region11: #{tpu_custom_call.1} parent=1 // pred_check_branch
      %36 = sbr.rel (0) target = $region13
    $region12: #{tpu_custom_call.1} parent=1 // pred_region
      %s38 = ssub.s32 512, 512
      %39 = vsyncadd [#allocation6], %s38
      %s41 = sshll.u32 [#allocation7], 4
      %s42 = int_to_ptr.vmem [resolvable:$true] %s41
      %44 = dma.hbm_to_vmem [thread:$0]  %s2, 512, %s42, [#allocation6]
    $region13: #{tpu_custom_call.1} parent=1 // pred_fallthru
      _
    // Predicated region
    $region14: #{tpu_custom_call.1} parent=1 // pred_check
      _
    $region15: #{tpu_custom_call.1} parent=1 // pred_check_branch
      %46 = sbr.rel (0) target = $region17
    $region16: #{tpu_custom_call.1} parent=1 // pred_region
      %47 = dma.done [#allocation3], 1024
    $region17: #{tpu_custom_call.1} parent=1 // pred_fallthru
      _
    // Predicated region
    $region18: #{tpu_custom_call.1} parent=1 // pred_check
      _
    $region19: #{tpu_custom_call.1} parent=1 // pred_check_branch
      %49 = sbr.rel (0) target = $region21
    $region20: #{tpu_custom_call.1} parent=1 // pred_region
      %50 = dma.done [#allocation6], 32768
    $region21: #{tpu_custom_call.1} parent=1 // pred_fallthru
      _
    // Predicated region
    $region22: #{tpu_custom_call.1} parent=1 // pred_check
      _
    $region23: #{tpu_custom_call.1} parent=1 // pred_check_branch
      %52 = sbr.rel (0) target = $region25
    $region24: #{tpu_custom_call.1} parent=1 // pred_region
      %53 = dma.done [#allocation6], 512
    $region25: #{tpu_custom_call.1} parent=1 // pred_fallthru
      _
    %v55 = vld [vmem:[#allocation2] sm:$0xff]
    %v56 = vld [vmem:[#allocation2 + $0x8] sm:$0xff]
    %v57 = vld [vmem:[#allocation2 + $0x10] sm:$0xff]
    %v58 = vld [vmem:[#allocation2 + $0x18] sm:$0xff]
    %v59 = vld [vmem:[#allocation2 + $0x20] sm:$0xff]
    %v60 = vld [vmem:[#allocation2 + $0x28] sm:$0xff]
    %v61 = vld [vmem:[#allocation2 + $0x30] sm:$0xff]
    %v62 = vld [vmem:[#allocation2 + $0x38] sm:$0xff]
    %v63 = vpack.c.bf16 %v56, %v55
    %v64 = vpack.c.bf16 %v58, %v57
    %v65 = vpack.c.bf16 %v60, %v59
    %v66 = vpack.c.bf16 %v62, %v61
    %v67 = vld [vmem:[#allocation5] sm:$0xff]
    %v68 = vld [vmem:[#allocation5 + $0x8] sm:$0xff]
    %v69 = vld [vmem:[#allocation5 + $0x10] sm:$0xff]
    %v70 = vld [vmem:[#allocation5 + $0x18] sm:$0xff]
    %v71 = vld [vmem:[#allocation5 + $0x20] sm:$0xff]
    %v72 = vld [vmem:[#allocation5 + $0x28] sm:$0xff]
    %v73 = vld [vmem:[#allocation5 + $0x30] sm:$0xff]
    %v74 = vld [vmem:[#allocation5 + $0x38] sm:$0xff]
    %v75 = vld [vmem:[#allocation5 + $0x40] sm:$0xff]
    %v76 = vld [vmem:[#allocation5 + $0x48] sm:$0xff]
    %v77 = vld [vmem:[#allocation5 + $0x50] sm:$0xff]
    %v78 = vld [vmem:[#allocation5 + $0x58] sm:$0xff]
    %v79 = vld [vmem:[#allocation5 + $0x60] sm:$0xff]
    %v80 = vld [vmem:[#allocation5 + $0x68] sm:$0xff]
    %v81 = vld [vmem:[#allocation5 + $0x70] sm:$0xff]
    %v82 = vld [vmem:[#allocation5 + $0x78] sm:$0xff]
    %v83 = vld [vmem:[#allocation5 + $0x80] sm:$0xff]
    %v84 = vld [vmem:[#allocation5 + $0x88] sm:$0xff]
    %v85 = vld [vmem:[#allocation5 + $0x90] sm:$0xff]
    %v86 = vld [vmem:[#allocation5 + $0x98] sm:$0xff]
    %v87 = vld [vmem:[#allocation5 + $0xa0] sm:$0xff]
    %v88 = vld [vmem:[#allocation5 + $0xa8] sm:$0xff]
    %v89 = vld [vmem:[#allocation5 + $0xb0] sm:$0xff]
    %v90 = vld [vmem:[#allocation5 + $0xb8] sm:$0xff]
    %v91 = vld [vmem:[#allocation5 + $0xc0] sm:$0xff]
    %v92 = vld [vmem:[#allocation5 + $0xc8] sm:$0xff]
    %v93 = vld [vmem:[#allocation5 + $0xd0] sm:$0xff]
    %v94 = vld [vmem:[#allocation5 + $0xd8] sm:$0xff]
    %v95 = vld [vmem:[#allocation5 + $0xe0] sm:$0xff]
    %v96 = vld [vmem:[#allocation5 + $0xe8] sm:$0xff]
    %v97 = vld [vmem:[#allocation5 + $0xf0] sm:$0xff]
    %v98 = vld [vmem:[#allocation5 + $0xf8] sm:$0xff]
    %v99 = vld [vmem:[#allocation5 + $0x100] sm:$0xff]
    %v100 = vld [vmem:[#allocation5 + $0x108] sm:$0xff]
    %v101 = vld [vmem:[#allocation5 + $0x110] sm:$0xff]
    %v102 = vld [vmem:[#allocation5 + $0x118] sm:$0xff]
    %v103 = vld [vmem:[#allocation5 + $0x120] sm:$0xff]
    %v104 = vld [vmem:[#allocation5 + $0x128] sm:$0xff]
    %v105 = vld [vmem:[#allocation5 + $0x130] sm:$0xff]
    %v106 = vld [vmem:[#allocation5 + $0x138] sm:$0xff]
    %v107 = vld [vmem:[#allocation5 + $0x140] sm:$0xff]
    %v108 = vld [vmem:[#allocation5 + $0x148] sm:$0xff]
    %v109 = vld [vmem:[#allocation5 + $0x150] sm:$0xff]
    %v110 = vld [vmem:[#allocation5 + $0x158] sm:$0xff]
    %v111 = vld [vmem:[#allocation5 + $0x160] sm:$0xff]
    %v112 = vld [vmem:[#allocation5 + $0x168] sm:$0xff]
    %v113 = vld [vmem:[#allocation5 + $0x170] sm:$0xff]
    %v114 = vld [vmem:[#allocation5 + $0x178] sm:$0xff]
    %v115 = vld [vmem:[#allocation5 + $0x180] sm:$0xff]
    %v116 = vld [vmem:[#allocation5 + $0x188] sm:$0xff]
    %v117 = vld [vmem:[#allocation5 + $0x190] sm:$0xff]
    %v118 = vld [vmem:[#allocation5 + $0x198] sm:$0xff]
    %v119 = vld [vmem:[#allocation5 + $0x1a0] sm:$0xff]
    %v120 = vld [vmem:[#allocation5 + $0x1a8] sm:$0xff]
    %v121 = vld [vmem:[#allocation5 + $0x1b0] sm:$0xff]
    %v122 = vld [vmem:[#allocation5 + $0x1b8] sm:$0xff]
    %v123 = vld [vmem:[#allocation5 + $0x1c0] sm:$0xff]
    %v124 = vld [vmem:[#allocation5 + $0x1c8] sm:$0xff]
    %v125 = vld [vmem:[#allocation5 + $0x1d0] sm:$0xff]
    %v126 = vld [vmem:[#allocation5 + $0x1d8] sm:$0xff]
    %v127 = vld [vmem:[#allocation5 + $0x1e0] sm:$0xff]
    %v128 = vld [vmem:[#allocation5 + $0x1e8] sm:$0xff]
    %v129 = vld [vmem:[#allocation5 + $0x1f0] sm:$0xff]
    %v130 = vld [vmem:[#allocation5 + $0x1f8] sm:$0xff]
    %v131 = vld [vmem:[#allocation5 + $0x200] sm:$0xff]
    %v132 = vld [vmem:[#allocation5 + $0x208] sm:$0xff]
    %v133 = vld [vmem:[#allocation5 + $0x210] sm:$0xff]
    %v134 = vld [vmem:[#allocation5 + $0x218] sm:$0xff]
    %v135 = vld [vmem:[#allocation5 + $0x220] sm:$0xff]
    %v136 = vld [vmem:[#allocation5 + $0x228] sm:$0xff]
    %v137 = vld [vmem:[#allocation5 + $0x230] sm:$0xff]
    %v138 = vld [vmem:[#allocation5 + $0x238] sm:$0xff]
    %v139 = vld [vmem:[#allocation5 + $0x240] sm:$0xff]
    %v140 = vld [vmem:[#allocation5 + $0x248] sm:$0xff]
    %v141 = vld [vmem:[#allocation5 + $0x250] sm:$0xff]
    %v142 = vld [vmem:[#allocation5 + $0x258] sm:$0xff]
    %v143 = vld [vmem:[#allocation5 + $0x260] sm:$0xff]
    %v144 = vld [vmem:[#allocation5 + $0x268] sm:$0xff]
    %v145 = vld [vmem:[#allocation5 + $0x270] sm:$0xff]
    %v146 = vld [vmem:[#allocation5 + $0x278] sm:$0xff]
    %v147 = vld [vmem:[#allocation5 + $0x280] sm:$0xff]
    %v148 = vld [vmem:[#allocation5 + $0x288] sm:$0xff]
    %v149 = vld [vmem:[#allocation5 + $0x290] sm:$0xff]
    %v150 = vld [vmem:[#allocation5 + $0x298] sm:$0xff]
    %v151 = vld [vmem:[#allocation5 + $0x2a0] sm:$0xff]
    %v152 = vld [vmem:[#allocation5 + $0x2a8] sm:$0xff]
    %v153 = vld [vmem:[#allocation5 + $0x2b0] sm:$0xff]
    %v154 = vld [vmem:[#allocation5 + $0x2b8] sm:$0xff]
    %v155 = vld [vmem:[#allocation5 + $0x2c0] sm:$0xff]
    %v156 = vld [vmem:[#allocation5 + $0x2c8] sm:$0xff]
    %v157 = vld [vmem:[#allocation5 + $0x2d0] sm:$0xff]
    %v158 = vld [vmem:[#allocation5 + $0x2d8] sm:$0xff]
    %v159 = vld [vmem:[#allocation5 + $0x2e0] sm:$0xff]
    %v160 = vld [vmem:[#allocation5 + $0x2e8] sm:$0xff]
    %v161 = vld [vmem:[#allocation5 + $0x2f0] sm:$0xff]
    %v162 = vld [vmem:[#allocation5 + $0x2f8] sm:$0xff]
    %v163 = vld [vmem:[#allocation5 + $0x300] sm:$0xff]
    %v164 = vld [vmem:[#allocation5 + $0x308] sm:$0xff]
    %v165 = vld [vmem:[#allocation5 + $0x310] sm:$0xff]
    %v166 = vld [vmem:[#allocation5 + $0x318] sm:$0xff]
    %v167 = vld [vmem:[#allocation5 + $0x320] sm:$0xff]
    %v168 = vld [vmem:[#allocation5 + $0x328] sm:$0xff]
    %v169 = vld [vmem:[#allocation5 + $0x330] sm:$0xff]
    %v170 = vld [vmem:[#allocation5 + $0x338] sm:$0xff]
    %v171 = vld [vmem:[#allocation5 + $0x340] sm:$0xff]
    %v172 = vld [vmem:[#allocation5 + $0x348] sm:$0xff]
    %v173 = vld [vmem:[#allocation5 + $0x350] sm:$0xff]
    %v174 = vld [vmem:[#allocation5 + $0x358] sm:$0xff]
    %v175 = vld [vmem:[#allocation5 + $0x360] sm:$0xff]
    %v176 = vld [vmem:[#allocation5 + $0x368] sm:$0xff]
    %v177 = vld [vmem:[#allocation5 + $0x370] sm:$0xff]
    %v178 = vld [vmem:[#allocation5 + $0x378] sm:$0xff]
    %v179 = vld [vmem:[#allocation5 + $0x380] sm:$0xff]
    %v180 = vld [vmem:[#allocation5 + $0x388] sm:$0xff]
    %v181 = vld [vmem:[#allocation5 + $0x390] sm:$0xff]
    %v182 = vld [vmem:[#allocation5 + $0x398] sm:$0xff]
    %v183 = vld [vmem:[#allocation5 + $0x3a0] sm:$0xff]
    %v184 = vld [vmem:[#allocation5 + $0x3a8] sm:$0xff]
    %v185 = vld [vmem:[#allocation5 + $0x3b0] sm:$0xff]
    %v186 = vld [vmem:[#allocation5 + $0x3b8] sm:$0xff]
    %v187 = vld [vmem:[#allocation5 + $0x3c0] sm:$0xff]
    %v188 = vld [vmem:[#allocation5 + $0x3c8] sm:$0xff]
    %v189 = vld [vmem:[#allocation5 + $0x3d0] sm:$0xff]
    %v190 = vld [vmem:[#allocation5 + $0x3d8] sm:$0xff]
    %v191 = vld [vmem:[#allocation5 + $0x3e0] sm:$0xff]
    %v192 = vld [vmem:[#allocation5 + $0x3e8] sm:$0xff]
    %v193 = vld [vmem:[#allocation5 + $0x3f0] sm:$0xff]
    %v194 = vld [vmem:[#allocation5 + $0x3f8] sm:$0xff]
    %v195 = vld [vmem:[#allocation5 + $0x400] sm:$0xff]
    %v196 = vld [vmem:[#allocation5 + $0x408] sm:$0xff]
    %v197 = vld [vmem:[#allocation5 + $0x410] sm:$0xff]
    %v198 = vld [vmem:[#allocation5 + $0x418] sm:$0xff]
    %v199 = vld [vmem:[#allocation5 + $0x420] sm:$0xff]
    %v200 = vld [vmem:[#allocation5 + $0x428] sm:$0xff]
    %v201 = vld [vmem:[#allocation5 + $0x430] sm:$0xff]
    %v202 = vld [vmem:[#allocation5 + $0x438] sm:$0xff]
    %v203 = vld [vmem:[#allocation5 + $0x440] sm:$0xff]
    %v204 = vld [vmem:[#allocation5 + $0x448] sm:$0xff]
    %v205 = vld [vmem:[#allocation5 + $0x450] sm:$0xff]
    %v206 = vld [vmem:[#allocation5 + $0x458] sm:$0xff]
    %v207 = vld [vmem:[#allocation5 + $0x460] sm:$0xff]
    %v208 = vld [vmem:[#allocation5 + $0x468] sm:$0xff]
    %v209 = vld [vmem:[#allocation5 + $0x470] sm:$0xff]
    %v210 = vld [vmem:[#allocation5 + $0x478] sm:$0xff]
    %v211 = vld [vmem:[#allocation5 + $0x480] sm:$0xff]
    %v212 = vld [vmem:[#allocation5 + $0x488] sm:$0xff]
    %v213 = vld [vmem:[#allocation5 + $0x490] sm:$0xff]
    %v214 = vld [vmem:[#allocation5 + $0x498] sm:$0xff]
    %v215 = vld [vmem:[#allocation5 + $0x4a0] sm:$0xff]
    %v216 = vld [vmem:[#allocation5 + $0x4a8] sm:$0xff]
    %v217 = vld [vmem:[#allocation5 + $0x4b0] sm:$0xff]
    %v218 = vld [vmem:[#allocation5 + $0x4b8] sm:$0xff]
    %v219 = vld [vmem:[#allocation5 + $0x4c0] sm:$0xff]
    %v220 = vld [vmem:[#allocation5 + $0x4c8] sm:$0xff]
    %v221 = vld [vmem:[#allocation5 + $0x4d0] sm:$0xff]
    %v222 = vld [vmem:[#allocation5 + $0x4d8] sm:$0xff]
    %v223 = vld [vmem:[#allocation5 + $0x4e0] sm:$0xff]
    %v224 = vld [vmem:[#allocation5 + $0x4e8] sm:$0xff]
    %v225 = vld [vmem:[#allocation5 + $0x4f0] sm:$0xff]
    %v226 = vld [vmem:[#allocation5 + $0x4f8] sm:$0xff]
    %v227 = vld [vmem:[#allocation5 + $0x500] sm:$0xff]
    %v228 = vld [vmem:[#allocation5 + $0x508] sm:$0xff]
    %v229 = vld [vmem:[#allocation5 + $0x510] sm:$0xff]
    %v230 = vld [vmem:[#allocation5 + $0x518] sm:$0xff]
    %v231 = vld [vmem:[#allocation5 + $0x520] sm:$0xff]
    %v232 = vld [vmem:[#allocation5 + $0x528] sm:$0xff]
    %v233 = vld [vmem:[#allocation5 + $0x530] sm:$0xff]
    %v234 = vld [vmem:[#allocation5 + $0x538] sm:$0xff]
    %v235 = vld [vmem:[#allocation5 + $0x540] sm:$0xff]
    %v236 = vld [vmem:[#allocation5 + $0x548] sm:$0xff]
    %v237 = vld [vmem:[#allocation5 + $0x550] sm:$0xff]
    %v238 = vld [vmem:[#allocation5 + $0x558] sm:$0xff]
    %v239 = vld [vmem:[#allocation5 + $0x560] sm:$0xff]
    %v240 = vld [vmem:[#allocation5 + $0x568] sm:$0xff]
    %v241 = vld [vmem:[#allocation5 + $0x570] sm:$0xff]
    %v242 = vld [vmem:[#allocation5 + $0x578] sm:$0xff]
    %v243 = vld [vmem:[#allocation5 + $0x580] sm:$0xff]
    %v244 = vld [vmem:[#allocation5 + $0x588] sm:$0xff]
    %v245 = vld [vmem:[#allocation5 + $0x590] sm:$0xff]
    %v246 = vld [vmem:[#allocation5 + $0x598] sm:$0xff]
    %v247 = vld [vmem:[#allocation5 + $0x5a0] sm:$0xff]
    %v248 = vld [vmem:[#allocation5 + $0x5a8] sm:$0xff]
    %v249 = vld [vmem:[#allocation5 + $0x5b0] sm:$0xff]
    %v250 = vld [vmem:[#allocation5 + $0x5b8] sm:$0xff]
    %v251 = vld [vmem:[#allocation5 + $0x5c0] sm:$0xff]
    %v252 = vld [vmem:[#allocation5 + $0x5c8] sm:$0xff]
    %v253 = vld [vmem:[#allocation5 + $0x5d0] sm:$0xff]
    %v254 = vld [vmem:[#allocation5 + $0x5d8] sm:$0xff]
    %v255 = vld [vmem:[#allocation5 + $0x5e0] sm:$0xff]
    %v256 = vld [vmem:[#allocation5 + $0x5e8] sm:$0xff]
    %v257 = vld [vmem:[#allocation5 + $0x5f0] sm:$0xff]
    %v258 = vld [vmem:[#allocation5 + $0x5f8] sm:$0xff]
    %v259 = vld [vmem:[#allocation5 + $0x600] sm:$0xff]
    %v260 = vld [vmem:[#allocation5 + $0x608] sm:$0xff]
    %v261 = vld [vmem:[#allocation5 + $0x610] sm:$0xff]
    %v262 = vld [vmem:[#allocation5 + $0x618] sm:$0xff]
    %v263 = vld [vmem:[#allocation5 + $0x620] sm:$0xff]
    %v264 = vld [vmem:[#allocation5 + $0x628] sm:$0xff]
    %v265 = vld [vmem:[#allocation5 + $0x630] sm:$0xff]
    %v266 = vld [vmem:[#allocation5 + $0x638] sm:$0xff]
    %v267 = vld [vmem:[#allocation5 + $0x640] sm:$0xff]
    %v268 = vld [vmem:[#allocation5 + $0x648] sm:$0xff]
    %v269 = vld [vmem:[#allocation5 + $0x650] sm:$0xff]
    %v270 = vld [vmem:[#allocation5 + $0x658] sm:$0xff]
    %v271 = vld [vmem:[#allocation5 + $0x660] sm:$0xff]
    %v272 = vld [vmem:[#allocation5 + $0x668] sm:$0xff]
    %v273 = vld [vmem:[#allocation5 + $0x670] sm:$0xff]
    %v274 = vld [vmem:[#allocation5 + $0x678] sm:$0xff]
    %v275 = vld [vmem:[#allocation5 + $0x680] sm:$0xff]
    %v276 = vld [vmem:[#allocation5 + $0x688] sm:$0xff]
    %v277 = vld [vmem:[#allocation5 + $0x690] sm:$0xff]
    %v278 = vld [vmem:[#allocation5 + $0x698] sm:$0xff]
    %v279 = vld [vmem:[#allocation5 + $0x6a0] sm:$0xff]
    %v280 = vld [vmem:[#allocation5 + $0x6a8] sm:$0xff]
    %v281 = vld [vmem:[#allocation5 + $0x6b0] sm:$0xff]
    %v282 = vld [vmem:[#allocation5 + $0x6b8] sm:$0xff]
    %v283 = vld [vmem:[#allocation5 + $0x6c0] sm:$0xff]
    %v284 = vld [vmem:[#allocation5 + $0x6c8] sm:$0xff]
    %v285 = vld [vmem:[#allocation5 + $0x6d0] sm:$0xff]
    %v286 = vld [vmem:[#allocation5 + $0x6d8] sm:$0xff]
    %v287 = vld [vmem:[#allocation5 + $0x6e0] sm:$0xff]
    %v288 = vld [vmem:[#allocation5 + $0x6e8] sm:$0xff]
    %v289 = vld [vmem:[#allocation5 + $0x6f0] sm:$0xff]
    %v290 = vld [vmem:[#allocation5 + $0x6f8] sm:$0xff]
    %v291 = vld [vmem:[#allocation5 + $0x700] sm:$0xff]
    %v292 = vld [vmem:[#allocation5 + $0x708] sm:$0xff]
    %v293 = vld [vmem:[#allocation5 + $0x710] sm:$0xff]
    %v294 = vld [vmem:[#allocation5 + $0x718] sm:$0xff]
    %v295 = vld [vmem:[#allocation5 + $0x720] sm:$0xff]
    %v296 = vld [vmem:[#allocation5 + $0x728] sm:$0xff]
    %v297 = vld [vmem:[#allocation5 + $0x730] sm:$0xff]
    %v298 = vld [vmem:[#allocation5 + $0x738] sm:$0xff]
    %v299 = vld [vmem:[#allocation5 + $0x740] sm:$0xff]
    %v300 = vld [vmem:[#allocation5 + $0x748] sm:$0xff]
    %v301 = vld [vmem:[#allocation5 + $0x750] sm:$0xff]
    %v302 = vld [vmem:[#allocation5 + $0x758] sm:$0xff]
    %v303 = vld [vmem:[#allocation5 + $0x760] sm:$0xff]
    %v304 = vld [vmem:[#allocation5 + $0x768] sm:$0xff]
    %v305 = vld [vmem:[#allocation5 + $0x770] sm:$0xff]
    %v306 = vld [vmem:[#allocation5 + $0x778] sm:$0xff]
    %v307 = vld [vmem:[#allocation5 + $0x780] sm:$0xff]
    %v308 = vld [vmem:[#allocation5 + $0x788] sm:$0xff]
    %v309 = vld [vmem:[#allocation5 + $0x790] sm:$0xff]
    %v310 = vld [vmem:[#allocation5 + $0x798] sm:$0xff]
    %v311 = vld [vmem:[#allocation5 + $0x7a0] sm:$0xff]
    %v312 = vld [vmem:[#allocation5 + $0x7a8] sm:$0xff]
    %v313 = vld [vmem:[#allocation5 + $0x7b0] sm:$0xff]
    %v314 = vld [vmem:[#allocation5 + $0x7b8] sm:$0xff]
    %v315 = vld [vmem:[#allocation5 + $0x7c0] sm:$0xff]
    %v316 = vld [vmem:[#allocation5 + $0x7c8] sm:$0xff]
    %v317 = vld [vmem:[#allocation5 + $0x7d0] sm:$0xff]
    %v318 = vld [vmem:[#allocation5 + $0x7d8] sm:$0xff]
    %v319 = vld [vmem:[#allocation5 + $0x7e0] sm:$0xff]
    %v320 = vld [vmem:[#allocation5 + $0x7e8] sm:$0xff]
    %v321 = vld [vmem:[#allocation5 + $0x7f0] sm:$0xff]
    %v322 = vld [vmem:[#allocation5 + $0x7f8] sm:$0xff]
    %v323 = vld [vmem:[#allocation7] sm:$0xff]
    %v324 = vld [vmem:[#allocation7 + $0x8] sm:$0xff]
    %v325 = vld [vmem:[#allocation7 + $0x10] sm:$0xff]
    %v326 = vld [vmem:[#allocation7 + $0x18] sm:$0xff]
    %v331 = vlaneseq
    %v332 = vshrl.u32 %v331, 7
    %v333 = vsub.s32 0, %v332
    %v334 = vrot.slane %v323, %v333
    %v335 = vlaneseq
    %v336 = vshrl.u32 %v335, 7
    %v337 = vsub.s32 1, %v336
    %v338 = vrot.slane %v323, %v337
    %v339 = vlaneseq
    %v340 = vshrl.u32 %v339, 7
    %v341 = vsub.s32 2, %v340
    %v342 = vrot.slane %v323, %v341
    %v343 = vlaneseq
    %v344 = vshrl.u32 %v343, 7
    %v345 = vsub.s32 3, %v344
    %v346 = vrot.slane %v323, %v345
    %v347 = vlaneseq
    %v348 = vshrl.u32 %v347, 7
    %v349 = vsub.s32 4, %v348
    %v350 = vrot.slane %v323, %v349
    %v351 = vlaneseq
    %v352 = vshrl.u32 %v351, 7
    %v353 = vsub.s32 5, %v352
    %v354 = vrot.slane %v323, %v353
    %v355 = vlaneseq
    %v356 = vshrl.u32 %v355, 7
    %v357 = vsub.s32 6, %v356
    %v358 = vrot.slane %v323, %v357
    %v359 = vlaneseq
    %v360 = vshrl.u32 %v359, 7
    %v361 = vsub.s32 7, %v360
    %v362 = vrot.slane %v323, %v361
    %v363 = vlaneseq
    %v364 = vshrl.u32 %v363, 7
    %v365 = vsub.s32 0, %v364
    %v366 = vrot.slane %v324, %v365
    %v367 = vlaneseq
    %v368 = vshrl.u32 %v367, 7
    %v369 = vsub.s32 1, %v368
    %v370 = vrot.slane %v324, %v369
    %v371 = vlaneseq
    %v372 = vshrl.u32 %v371, 7
    %v373 = vsub.s32 2, %v372
    %v374 = vrot.slane %v324, %v373
    %v375 = vlaneseq
    %v376 = vshrl.u32 %v375, 7
    %v377 = vsub.s32 3, %v376
    %v378 = vrot.slane %v324, %v377
    %v379 = vlaneseq
    %v380 = vshrl.u32 %v379, 7
    %v381 = vsub.s32 4, %v380
    %v382 = vrot.slane %v324, %v381
    %v383 = vlaneseq
    %v384 = vshrl.u32 %v383, 7
    %v385 = vsub.s32 5, %v384
    %v386 = vrot.slane %v324, %v385
    %v387 = vlaneseq
    %v388 = vshrl.u32 %v387, 7
    %v389 = vsub.s32 6, %v388
    %v390 = vrot.slane %v324, %v389
    %v391 = vlaneseq
    %v392 = vshrl.u32 %v391, 7
    %v393 = vsub.s32 7, %v392
    %v394 = vrot.slane %v324, %v393
    %v395 = vlaneseq
    %v396 = vshrl.u32 %v395, 7
    %v397 = vsub.s32 0, %v396
    %v398 = vrot.slane %v325, %v397
    %v399 = vlaneseq
    %v400 = vshrl.u32 %v399, 7
    %v401 = vsub.s32 1, %v400
    %v402 = vrot.slane %v325, %v401
    %v403 = vlaneseq
    %v404 = vshrl.u32 %v403, 7
    %v405 = vsub.s32 2, %v404
    %v406 = vrot.slane %v325, %v405
    %v407 = vlaneseq
    %v408 = vshrl.u32 %v407, 7
    %v409 = vsub.s32 3, %v408
    %v410 = vrot.slane %v325, %v409
    %v411 = vlaneseq
    %v412 = vshrl.u32 %v411, 7
    %v413 = vsub.s32 4, %v412
    %v414 = vrot.slane %v325, %v413
    %v415 = vlaneseq
    %v416 = vshrl.u32 %v415, 7
    %v417 = vsub.s32 5, %v416
    %v418 = vrot.slane %v325, %v417
    %v419 = vlaneseq
    %v420 = vshrl.u32 %v419, 7
    %v421 = vsub.s32 6, %v420
    %v422 = vrot.slane %v325, %v421
    %v423 = vlaneseq
    %v424 = vshrl.u32 %v423, 7
    %v425 = vsub.s32 7, %v424
    %v426 = vrot.slane %v325, %v425
    %v427 = vlaneseq
    %v428 = vshrl.u32 %v427, 7
    %v429 = vsub.s32 0, %v428
    %v430 = vrot.slane %v326, %v429
    %v431 = vlaneseq
    %v432 = vshrl.u32 %v431, 7
    %v433 = vsub.s32 1, %v432
    %v434 = vrot.slane %v326, %v433
    %v435 = vlaneseq
    %v436 = vshrl.u32 %v435, 7
    %v437 = vsub.s32 2, %v436
    %v438 = vrot.slane %v326, %v437
    %v439 = vlaneseq
    %v440 = vshrl.u32 %v439, 7
    %v441 = vsub.s32 3, %v440
    %v442 = vrot.slane %v326, %v441
    %v443 = vlaneseq
    %v444 = vshrl.u32 %v443, 7
    %v445 = vsub.s32 4, %v444
    %v446 = vrot.slane %v326, %v445
    %v447 = vlaneseq
    %v448 = vshrl.u32 %v447, 7
    %v449 = vsub.s32 5, %v448
    %v450 = vrot.slane %v326, %v449
    %v451 = vlaneseq
    %v452 = vshrl.u32 %v451, 7
    %v453 = vsub.s32 6, %v452
    %v454 = vrot.slane %v326, %v453
    %v455 = vlaneseq
    %v456 = vshrl.u32 %v455, 7
    %v457 = vsub.s32 7, %v456
    %v458 = vrot.slane %v326, %v457
    %v747 = vunpack.c.l.b16 %v67
    %v748 = vunpack.c.h.b16 %v67
    %v749 = vunpack.c.l.b16 %v68
    %v750 = vunpack.c.h.b16 %v68
    %v751 = vunpack.c.l.b16 %v69
    %v752 = vunpack.c.h.b16 %v69
    %v753 = vunpack.c.l.b16 %v70
    %v754 = vunpack.c.h.b16 %v70
    %v755 = vunpack.c.l.b16 %v71
    %v756 = vunpack.c.h.b16 %v71
    %v757 = vunpack.c.l.b16 %v72
    %v758 = vunpack.c.h.b16 %v72
    %v759 = vunpack.c.l.b16 %v73
    %v760 = vunpack.c.h.b16 %v73
    %v761 = vunpack.c.l.b16 %v74
    %v762 = vunpack.c.h.b16 %v74
    %v763 = vunpack.c.l.b16 %v75
    %v764 = vunpack.c.h.b16 %v75
    %v765 = vunpack.c.l.b16 %v76
    %v766 = vunpack.c.h.b16 %v76
    %v767 = vunpack.c.l.b16 %v77
    %v768 = vunpack.c.h.b16 %v77
    %v769 = vunpack.c.l.b16 %v78
    %v770 = vunpack.c.h.b16 %v78
    %v771 = vunpack.c.l.b16 %v79
    %v772 = vunpack.c.h.b16 %v79
    %v773 = vunpack.c.l.b16 %v80
    %v774 = vunpack.c.h.b16 %v80
    %v775 = vunpack.c.l.b16 %v81
    %v776 = vunpack.c.h.b16 %v81
    %v777 = vunpack.c.l.b16 %v82
    %v778 = vunpack.c.h.b16 %v82
    %v779 = vunpack.c.l.b16 %v83
    %v780 = vunpack.c.h.b16 %v83
    %v781 = vunpack.c.l.b16 %v84
    %v782 = vunpack.c.h.b16 %v84
    %v783 = vunpack.c.l.b16 %v85
    %v784 = vunpack.c.h.b16 %v85
    %v785 = vunpack.c.l.b16 %v86
    %v786 = vunpack.c.h.b16 %v86
    %v787 = vunpack.c.l.b16 %v87
    %v788 = vunpack.c.h.b16 %v87
    %v789 = vunpack.c.l.b16 %v88
    %v790 = vunpack.c.h.b16 %v88
    %v791 = vunpack.c.l.b16 %v89
    %v792 = vunpack.c.h.b16 %v89
    %v793 = vunpack.c.l.b16 %v90
    %v794 = vunpack.c.h.b16 %v90
    %v795 = vunpack.c.l.b16 %v91
    %v796 = vunpack.c.h.b16 %v91
    %v797 = vunpack.c.l.b16 %v92
    %v798 = vunpack.c.h.b16 %v92
    %v799 = vunpack.c.l.b16 %v93
    %v800 = vunpack.c.h.b16 %v93
    %v801 = vunpack.c.l.b16 %v94
    %v802 = vunpack.c.h.b16 %v94
    %v803 = vunpack.c.l.b16 %v95
    %v804 = vunpack.c.h.b16 %v95
    %v805 = vunpack.c.l.b16 %v96
    %v806 = vunpack.c.h.b16 %v96
    %v807 = vunpack.c.l.b16 %v97
    %v808 = vunpack.c.h.b16 %v97
    %v809 = vunpack.c.l.b16 %v98
    %v810 = vunpack.c.h.b16 %v98
    %v811 = vunpack.c.l.b16 %v99
    %v812 = vunpack.c.h.b16 %v99
    %v813 = vunpack.c.l.b16 %v100
    %v814 = vunpack.c.h.b16 %v100
    %v815 = vunpack.c.l.b16 %v101
    %v816 = vunpack.c.h.b16 %v101
    %v817 = vunpack.c.l.b16 %v102
    %v818 = vunpack.c.h.b16 %v102
    %v819 = vunpack.c.l.b16 %v103
    %v820 = vunpack.c.h.b16 %v103
    %v821 = vunpack.c.l.b16 %v104
    %v822 = vunpack.c.h.b16 %v104
    %v823 = vunpack.c.l.b16 %v105
    %v824 = vunpack.c.h.b16 %v105
    %v825 = vunpack.c.l.b16 %v106
    %v826 = vunpack.c.h.b16 %v106
    %v827 = vunpack.c.l.b16 %v107
    %v828 = vunpack.c.h.b16 %v107
    %v829 = vunpack.c.l.b16 %v108
    %v830 = vunpack.c.h.b16 %v108
    %v831 = vunpack.c.l.b16 %v109
    %v832 = vunpack.c.h.b16 %v109
    %v833 = vunpack.c.l.b16 %v110
    %v834 = vunpack.c.h.b16 %v110
    %v835 = vunpack.c.l.b16 %v111
    %v836 = vunpack.c.h.b16 %v111
    %v837 = vunpack.c.l.b16 %v112
    %v838 = vunpack.c.h.b16 %v112
    %v839 = vunpack.c.l.b16 %v113
    %v840 = vunpack.c.h.b16 %v113
    %v841 = vunpack.c.l.b16 %v114
    %v842 = vunpack.c.h.b16 %v114
    %v843 = vunpack.c.l.b16 %v115
    %v844 = vunpack.c.h.b16 %v115
    %v845 = vunpack.c.l.b16 %v116
    %v846 = vunpack.c.h.b16 %v116
    %v847 = vunpack.c.l.b16 %v117
    %v848 = vunpack.c.h.b16 %v117
    %v849 = vunpack.c.l.b16 %v118
    %v850 = vunpack.c.h.b16 %v118
    %v851 = vunpack.c.l.b16 %v119
    %v852 = vunpack.c.h.b16 %v119
    %v853 = vunpack.c.l.b16 %v120
    %v854 = vunpack.c.h.b16 %v120
    %v855 = vunpack.c.l.b16 %v121
    %v856 = vunpack.c.h.b16 %v121
    %v857 = vunpack.c.l.b16 %v122
    %v858 = vunpack.c.h.b16 %v122
    %v859 = vunpack.c.l.b16 %v123
    %v860 = vunpack.c.h.b16 %v123
    %v861 = vunpack.c.l.b16 %v124
    %v862 = vunpack.c.h.b16 %v124
    %v863 = vunpack.c.l.b16 %v125
    %v864 = vunpack.c.h.b16 %v125
    %v865 = vunpack.c.l.b16 %v126
    %v866 = vunpack.c.h.b16 %v126
    %v867 = vunpack.c.l.b16 %v127
    %v868 = vunpack.c.h.b16 %v127
    %v869 = vunpack.c.l.b16 %v128
    %v870 = vunpack.c.h.b16 %v128
    %v871 = vunpack.c.l.b16 %v129
    %v872 = vunpack.c.h.b16 %v129
    %v873 = vunpack.c.l.b16 %v130
    %v874 = vunpack.c.h.b16 %v130
    %v875 = vunpack.c.l.b16 %v131
    %v876 = vunpack.c.h.b16 %v131
    %v877 = vunpack.c.l.b16 %v132
    %v878 = vunpack.c.h.b16 %v132
    %v879 = vunpack.c.l.b16 %v133
    %v880 = vunpack.c.h.b16 %v133
    %v881 = vunpack.c.l.b16 %v134
    %v882 = vunpack.c.h.b16 %v134
    %v883 = vunpack.c.l.b16 %v135
    %v884 = vunpack.c.h.b16 %v135
    %v885 = vunpack.c.l.b16 %v136
    %v886 = vunpack.c.h.b16 %v136
    %v887 = vunpack.c.l.b16 %v137
    %v888 = vunpack.c.h.b16 %v137
    %v889 = vunpack.c.l.b16 %v138
    %v890 = vunpack.c.h.b16 %v138
    %v891 = vunpack.c.l.b16 %v139
    %v892 = vunpack.c.h.b16 %v139
    %v893 = vunpack.c.l.b16 %v140
    %v894 = vunpack.c.h.b16 %v140
    %v895 = vunpack.c.l.b16 %v141
    %v896 = vunpack.c.h.b16 %v141
    %v897 = vunpack.c.l.b16 %v142
    %v898 = vunpack.c.h.b16 %v142
    %v899 = vunpack.c.l.b16 %v143
    %v900 = vunpack.c.h.b16 %v143
    %v901 = vunpack.c.l.b16 %v144
    %v902 = vunpack.c.h.b16 %v144
    %v903 = vunpack.c.l.b16 %v145
    %v904 = vunpack.c.h.b16 %v145
    %v905 = vunpack.c.l.b16 %v146
    %v906 = vunpack.c.h.b16 %v146
    %v907 = vunpack.c.l.b16 %v147
    %v908 = vunpack.c.h.b16 %v147
    %v909 = vunpack.c.l.b16 %v148
    %v910 = vunpack.c.h.b16 %v148
    %v911 = vunpack.c.l.b16 %v149
    %v912 = vunpack.c.h.b16 %v149
    %v913 = vunpack.c.l.b16 %v150
    %v914 = vunpack.c.h.b16 %v150
    %v915 = vunpack.c.l.b16 %v151
    %v916 = vunpack.c.h.b16 %v151
    %v917 = vunpack.c.l.b16 %v152
    %v918 = vunpack.c.h.b16 %v152
    %v919 = vunpack.c.l.b16 %v153
    %v920 = vunpack.c.h.b16 %v153
    %v921 = vunpack.c.l.b16 %v154
    %v922 = vunpack.c.h.b16 %v154
    %v923 = vunpack.c.l.b16 %v155
    %v924 = vunpack.c.h.b16 %v155
    %v925 = vunpack.c.l.b16 %v156
    %v926 = vunpack.c.h.b16 %v156
    %v927 = vunpack.c.l.b16 %v157
    %v928 = vunpack.c.h.b16 %v157
    %v929 = vunpack.c.l.b16 %v158
    %v930 = vunpack.c.h.b16 %v158
    %v931 = vunpack.c.l.b16 %v159
    %v932 = vunpack.c.h.b16 %v159
    %v933 = vunpack.c.l.b16 %v160
    %v934 = vunpack.c.h.b16 %v160
    %v935 = vunpack.c.l.b16 %v161
    %v936 = vunpack.c.h.b16 %v161
    %v937 = vunpack.c.l.b16 %v162
    %v938 = vunpack.c.h.b16 %v162
    %v939 = vunpack.c.l.b16 %v163
    %v940 = vunpack.c.h.b16 %v163
    %v941 = vunpack.c.l.b16 %v164
    %v942 = vunpack.c.h.b16 %v164
    %v943 = vunpack.c.l.b16 %v165
    %v944 = vunpack.c.h.b16 %v165
    %v945 = vunpack.c.l.b16 %v166
    %v946 = vunpack.c.h.b16 %v166
    %v947 = vunpack.c.l.b16 %v167
    %v948 = vunpack.c.h.b16 %v167
    %v949 = vunpack.c.l.b16 %v168
    %v950 = vunpack.c.h.b16 %v168
    %v951 = vunpack.c.l.b16 %v169
    %v952 = vunpack.c.h.b16 %v169
    %v953 = vunpack.c.l.b16 %v170
    %v954 = vunpack.c.h.b16 %v170
    %v955 = vunpack.c.l.b16 %v171
    %v956 = vunpack.c.h.b16 %v171
    %v957 = vunpack.c.l.b16 %v172
    %v958 = vunpack.c.h.b16 %v172
    %v959 = vunpack.c.l.b16 %v173
    %v960 = vunpack.c.h.b16 %v173
    %v961 = vunpack.c.l.b16 %v174
    %v962 = vunpack.c.h.b16 %v174
    %v963 = vunpack.c.l.b16 %v175
    %v964 = vunpack.c.h.b16 %v175
    %v965 = vunpack.c.l.b16 %v176
    %v966 = vunpack.c.h.b16 %v176
    %v967 = vunpack.c.l.b16 %v177
    %v968 = vunpack.c.h.b16 %v177
    %v969 = vunpack.c.l.b16 %v178
    %v970 = vunpack.c.h.b16 %v178
    %v971 = vunpack.c.l.b16 %v179
    %v972 = vunpack.c.h.b16 %v179
    %v973 = vunpack.c.l.b16 %v180
    %v974 = vunpack.c.h.b16 %v180
    %v975 = vunpack.c.l.b16 %v181
    %v976 = vunpack.c.h.b16 %v181
    %v977 = vunpack.c.l.b16 %v182
    %v978 = vunpack.c.h.b16 %v182
    %v979 = vunpack.c.l.b16 %v183
    %v980 = vunpack.c.h.b16 %v183
    %v981 = vunpack.c.l.b16 %v184
    %v982 = vunpack.c.h.b16 %v184
    %v983 = vunpack.c.l.b16 %v185
    %v984 = vunpack.c.h.b16 %v185
    %v985 = vunpack.c.l.b16 %v186
    %v986 = vunpack.c.h.b16 %v186
    %v987 = vunpack.c.l.b16 %v187
    %v988 = vunpack.c.h.b16 %v187
    %v989 = vunpack.c.l.b16 %v188
    %v990 = vunpack.c.h.b16 %v188
    %v991 = vunpack.c.l.b16 %v189
    %v992 = vunpack.c.h.b16 %v189
    %v993 = vunpack.c.l.b16 %v190
    %v994 = vunpack.c.h.b16 %v190
    %v995 = vunpack.c.l.b16 %v191
    %v996 = vunpack.c.h.b16 %v191
    %v997 = vunpack.c.l.b16 %v192
    %v998 = vunpack.c.h.b16 %v192
    %v999 = vunpack.c.l.b16 %v193
    %v1000 = vunpack.c.h.b16 %v193
    %v1001 = vunpack.c.l.b16 %v194
    %v1002 = vunpack.c.h.b16 %v194
    %v1003 = vunpack.c.l.b16 %v195
    %v1004 = vunpack.c.h.b16 %v195
    %v1005 = vunpack.c.l.b16 %v196
    %v1006 = vunpack.c.h.b16 %v196
    %v1007 = vunpack.c.l.b16 %v197
    %v1008 = vunpack.c.h.b16 %v197
    %v1009 = vunpack.c.l.b16 %v198
    %v1010 = vunpack.c.h.b16 %v198
    %v1011 = vunpack.c.l.b16 %v199
    %v1012 = vunpack.c.h.b16 %v199
    %v1013 = vunpack.c.l.b16 %v200
    %v1014 = vunpack.c.h.b16 %v200
    %v1015 = vunpack.c.l.b16 %v201
    %v1016 = vunpack.c.h.b16 %v201
    %v1017 = vunpack.c.l.b16 %v202
    %v1018 = vunpack.c.h.b16 %v202
    %v1019 = vunpack.c.l.b16 %v203
    %v1020 = vunpack.c.h.b16 %v203
    %v1021 = vunpack.c.l.b16 %v204
    %v1022 = vunpack.c.h.b16 %v204
    %v1023 = vunpack.c.l.b16 %v205
    %v1024 = vunpack.c.h.b16 %v205
    %v1025 = vunpack.c.l.b16 %v206
    %v1026 = vunpack.c.h.b16 %v206
    %v1027 = vunpack.c.l.b16 %v207
    %v1028 = vunpack.c.h.b16 %v207
    %v1029 = vunpack.c.l.b16 %v208
    %v1030 = vunpack.c.h.b16 %v208
    %v1031 = vunpack.c.l.b16 %v209
    %v1032 = vunpack.c.h.b16 %v209
    %v1033 = vunpack.c.l.b16 %v210
    %v1034 = vunpack.c.h.b16 %v210
    %v1035 = vunpack.c.l.b16 %v211
    %v1036 = vunpack.c.h.b16 %v211
    %v1037 = vunpack.c.l.b16 %v212
    %v1038 = vunpack.c.h.b16 %v212
    %v1039 = vunpack.c.l.b16 %v213
    %v1040 = vunpack.c.h.b16 %v213
    %v1041 = vunpack.c.l.b16 %v214
    %v1042 = vunpack.c.h.b16 %v214
    %v1043 = vunpack.c.l.b16 %v215
    %v1044 = vunpack.c.h.b16 %v215
    %v1045 = vunpack.c.l.b16 %v216
    %v1046 = vunpack.c.h.b16 %v216
    %v1047 = vunpack.c.l.b16 %v217
    %v1048 = vunpack.c.h.b16 %v217
    %v1049 = vunpack.c.l.b16 %v218
    %v1050 = vunpack.c.h.b16 %v218
    %v1051 = vunpack.c.l.b16 %v219
    %v1052 = vunpack.c.h.b16 %v219
    %v1053 = vunpack.c.l.b16 %v220
    %v1054 = vunpack.c.h.b16 %v220
    %v1055 = vunpack.c.l.b16 %v221
    %v1056 = vunpack.c.h.b16 %v221
    %v1057 = vunpack.c.l.b16 %v222
    %v1058 = vunpack.c.h.b16 %v222
    %v1059 = vunpack.c.l.b16 %v223
    %v1060 = vunpack.c.h.b16 %v223
    %v1061 = vunpack.c.l.b16 %v224
    %v1062 = vunpack.c.h.b16 %v224
    %v1063 = vunpack.c.l.b16 %v225
    %v1064 = vunpack.c.h.b16 %v225
    %v1065 = vunpack.c.l.b16 %v226
    %v1066 = vunpack.c.h.b16 %v226
    %v1067 = vunpack.c.l.b16 %v227
    %v1068 = vunpack.c.h.b16 %v227
    %v1069 = vunpack.c.l.b16 %v228
    %v1070 = vunpack.c.h.b16 %v228
    %v1071 = vunpack.c.l.b16 %v229
    %v1072 = vunpack.c.h.b16 %v229
    %v1073 = vunpack.c.l.b16 %v230
    %v1074 = vunpack.c.h.b16 %v230
    %v1075 = vunpack.c.l.b16 %v231
    %v1076 = vunpack.c.h.b16 %v231
    %v1077 = vunpack.c.l.b16 %v232
    %v1078 = vunpack.c.h.b16 %v232
    %v1079 = vunpack.c.l.b16 %v233
    %v1080 = vunpack.c.h.b16 %v233
    %v1081 = vunpack.c.l.b16 %v234
    %v1082 = vunpack.c.h.b16 %v234
    %v1083 = vunpack.c.l.b16 %v235
    %v1084 = vunpack.c.h.b16 %v235
    %v1085 = vunpack.c.l.b16 %v236
    %v1086 = vunpack.c.h.b16 %v236
    %v1087 = vunpack.c.l.b16 %v237
    %v1088 = vunpack.c.h.b16 %v237
    %v1089 = vunpack.c.l.b16 %v238
    %v1090 = vunpack.c.h.b16 %v238
    %v1091 = vunpack.c.l.b16 %v239
    %v1092 = vunpack.c.h.b16 %v239
    %v1093 = vunpack.c.l.b16 %v240
    %v1094 = vunpack.c.h.b16 %v240
    %v1095 = vunpack.c.l.b16 %v241
    %v1096 = vunpack.c.h.b16 %v241
    %v1097 = vunpack.c.l.b16 %v242
    %v1098 = vunpack.c.h.b16 %v242
    %v1099 = vunpack.c.l.b16 %v243
    %v1100 = vunpack.c.h.b16 %v243
    %v1101 = vunpack.c.l.b16 %v244
    %v1102 = vunpack.c.h.b16 %v244
    %v1103 = vunpack.c.l.b16 %v245
    %v1104 = vunpack.c.h.b16 %v245
    %v1105 = vunpack.c.l.b16 %v246
    %v1106 = vunpack.c.h.b16 %v246
    %v1107 = vunpack.c.l.b16 %v247
    %v1108 = vunpack.c.h.b16 %v247
    %v1109 = vunpack.c.l.b16 %v248
    %v1110 = vunpack.c.h.b16 %v248
    %v1111 = vunpack.c.l.b16 %v249
    %v1112 = vunpack.c.h.b16 %v249
    %v1113 = vunpack.c.l.b16 %v250
    %v1114 = vunpack.c.h.b16 %v250
    %v1115 = vunpack.c.l.b16 %v251
    %v1116 = vunpack.c.h.b16 %v251
    %v1117 = vunpack.c.l.b16 %v252
    %v1118 = vunpack.c.h.b16 %v252
    %v1119 = vunpack.c.l.b16 %v253
    %v1120 = vunpack.c.h.b16 %v253
    %v1121 = vunpack.c.l.b16 %v254
    %v1122 = vunpack.c.h.b16 %v254
    %v1123 = vunpack.c.l.b16 %v255
    %v1124 = vunpack.c.h.b16 %v255
    %v1125 = vunpack.c.l.b16 %v256
    %v1126 = vunpack.c.h.b16 %v256
    %v1127 = vunpack.c.l.b16 %v257
    %v1128 = vunpack.c.h.b16 %v257
    %v1129 = vunpack.c.l.b16 %v258
    %v1130 = vunpack.c.h.b16 %v258
    %v1131 = vunpack.c.l.b16 %v259
    %v1132 = vunpack.c.h.b16 %v259
    %v1133 = vunpack.c.l.b16 %v260
    %v1134 = vunpack.c.h.b16 %v260
    %v1135 = vunpack.c.l.b16 %v261
    %v1136 = vunpack.c.h.b16 %v261
    %v1137 = vunpack.c.l.b16 %v262
    %v1138 = vunpack.c.h.b16 %v262
    %v1139 = vunpack.c.l.b16 %v263
    %v1140 = vunpack.c.h.b16 %v263
    %v1141 = vunpack.c.l.b16 %v264
    %v1142 = vunpack.c.h.b16 %v264
    %v1143 = vunpack.c.l.b16 %v265
    %v1144 = vunpack.c.h.b16 %v265
    %v1145 = vunpack.c.l.b16 %v266
    %v1146 = vunpack.c.h.b16 %v266
    %v1147 = vunpack.c.l.b16 %v267
    %v1148 = vunpack.c.h.b16 %v267
    %v1149 = vunpack.c.l.b16 %v268
    %v1150 = vunpack.c.h.b16 %v268
    %v1151 = vunpack.c.l.b16 %v269
    %v1152 = vunpack.c.h.b16 %v269
    %v1153 = vunpack.c.l.b16 %v270
    %v1154 = vunpack.c.h.b16 %v270
    %v1155 = vunpack.c.l.b16 %v271
    %v1156 = vunpack.c.h.b16 %v271
    %v1157 = vunpack.c.l.b16 %v272
    %v1158 = vunpack.c.h.b16 %v272
    %v1159 = vunpack.c.l.b16 %v273
    %v1160 = vunpack.c.h.b16 %v273
    %v1161 = vunpack.c.l.b16 %v274
    %v1162 = vunpack.c.h.b16 %v274
    %v1163 = vunpack.c.l.b16 %v275
    %v1164 = vunpack.c.h.b16 %v275
    %v1165 = vunpack.c.l.b16 %v276
    %v1166 = vunpack.c.h.b16 %v276
    %v1167 = vunpack.c.l.b16 %v277
    %v1168 = vunpack.c.h.b16 %v277
    %v1169 = vunpack.c.l.b16 %v278
    %v1170 = vunpack.c.h.b16 %v278
    %v1171 = vunpack.c.l.b16 %v279
    %v1172 = vunpack.c.h.b16 %v279
    %v1173 = vunpack.c.l.b16 %v280
    %v1174 = vunpack.c.h.b16 %v280
    %v1175 = vunpack.c.l.b16 %v281
    %v1176 = vunpack.c.h.b16 %v281
    %v1177 = vunpack.c.l.b16 %v282
    %v1178 = vunpack.c.h.b16 %v282
    %v1179 = vunpack.c.l.b16 %v283
    %v1180 = vunpack.c.h.b16 %v283
    %v1181 = vunpack.c.l.b16 %v284
    %v1182 = vunpack.c.h.b16 %v284
    %v1183 = vunpack.c.l.b16 %v285
    %v1184 = vunpack.c.h.b16 %v285
    %v1185 = vunpack.c.l.b16 %v286
    %v1186 = vunpack.c.h.b16 %v286
    %v1187 = vunpack.c.l.b16 %v287
    %v1188 = vunpack.c.h.b16 %v287
    %v1189 = vunpack.c.l.b16 %v288
    %v1190 = vunpack.c.h.b16 %v288
    %v1191 = vunpack.c.l.b16 %v289
    %v1192 = vunpack.c.h.b16 %v289
    %v1193 = vunpack.c.l.b16 %v290
    %v1194 = vunpack.c.h.b16 %v290
    %v1195 = vunpack.c.l.b16 %v291
    %v1196 = vunpack.c.h.b16 %v291
    %v1197 = vunpack.c.l.b16 %v292
    %v1198 = vunpack.c.h.b16 %v292
    %v1199 = vunpack.c.l.b16 %v293
    %v1200 = vunpack.c.h.b16 %v293
    %v1201 = vunpack.c.l.b16 %v294
    %v1202 = vunpack.c.h.b16 %v294
    %v1203 = vunpack.c.l.b16 %v295
    %v1204 = vunpack.c.h.b16 %v295
    %v1205 = vunpack.c.l.b16 %v296
    %v1206 = vunpack.c.h.b16 %v296
    %v1207 = vunpack.c.l.b16 %v297
    %v1208 = vunpack.c.h.b16 %v297
    %v1209 = vunpack.c.l.b16 %v298
    %v1210 = vunpack.c.h.b16 %v298
    %v1211 = vunpack.c.l.b16 %v299
    %v1212 = vunpack.c.h.b16 %v299
    %v1213 = vunpack.c.l.b16 %v300
    %v1214 = vunpack.c.h.b16 %v300
    %v1215 = vunpack.c.l.b16 %v301
    %v1216 = vunpack.c.h.b16 %v301
    %v1217 = vunpack.c.l.b16 %v302
    %v1218 = vunpack.c.h.b16 %v302
    %v1219 = vunpack.c.l.b16 %v303
    %v1220 = vunpack.c.h.b16 %v303
    %v1221 = vunpack.c.l.b16 %v304
    %v1222 = vunpack.c.h.b16 %v304
    %v1223 = vunpack.c.l.b16 %v305
    %v1224 = vunpack.c.h.b16 %v305
    %v1225 = vunpack.c.l.b16 %v306
    %v1226 = vunpack.c.h.b16 %v306
    %v1227 = vunpack.c.l.b16 %v307
    %v1228 = vunpack.c.h.b16 %v307
    %v1229 = vunpack.c.l.b16 %v308
    %v1230 = vunpack.c.h.b16 %v308
    %v1231 = vunpack.c.l.b16 %v309
    %v1232 = vunpack.c.h.b16 %v309
    %v1233 = vunpack.c.l.b16 %v310
    %v1234 = vunpack.c.h.b16 %v310
    %v1235 = vunpack.c.l.b16 %v311
    %v1236 = vunpack.c.h.b16 %v311
    %v1237 = vunpack.c.l.b16 %v312
    %v1238 = vunpack.c.h.b16 %v312
    %v1239 = vunpack.c.l.b16 %v313
    %v1240 = vunpack.c.h.b16 %v313
    %v1241 = vunpack.c.l.b16 %v314
    %v1242 = vunpack.c.h.b16 %v314
    %v1243 = vunpack.c.l.b16 %v315
    %v1244 = vunpack.c.h.b16 %v315
    %v1245 = vunpack.c.l.b16 %v316
    %v1246 = vunpack.c.h.b16 %v316
    %v1247 = vunpack.c.l.b16 %v317
    %v1248 = vunpack.c.h.b16 %v317
    %v1249 = vunpack.c.l.b16 %v318
    %v1250 = vunpack.c.h.b16 %v318
    %v1251 = vunpack.c.l.b16 %v319
    %v1252 = vunpack.c.h.b16 %v319
    %v1253 = vunpack.c.l.b16 %v320
    %v1254 = vunpack.c.h.b16 %v320
    %v1255 = vunpack.c.l.b16 %v321
    %v1256 = vunpack.c.h.b16 %v321
    %v1257 = vunpack.c.l.b16 %v322
    %v1258 = vunpack.c.h.b16 %v322
    %v1259 = vpack.c.b16 %v779, %v747
    %v1260 = vpack.c.b16 %v780, %v748
    %v1261 = vpack.c.b16 %v781, %v749
    %v1262 = vpack.c.b16 %v782, %v750
    %v1263 = vpack.c.b16 %v783, %v751
    %v1264 = vpack.c.b16 %v784, %v752
    %v1265 = vpack.c.b16 %v785, %v753
    %v1266 = vpack.c.b16 %v786, %v754
    %v1267 = vpack.c.b16 %v787, %v755
    %v1268 = vpack.c.b16 %v788, %v756
    %v1269 = vpack.c.b16 %v789, %v757
    %v1270 = vpack.c.b16 %v790, %v758
    %v1271 = vpack.c.b16 %v791, %v759
    %v1272 = vpack.c.b16 %v792, %v760
    %v1273 = vpack.c.b16 %v793, %v761
    %v1274 = vpack.c.b16 %v794, %v762
    %v1275 = vpack.c.b16 %v795, %v763
    %v1276 = vpack.c.b16 %v796, %v764
    %v1277 = vpack.c.b16 %v797, %v765
    %v1278 = vpack.c.b16 %v798, %v766
    %v1279 = vpack.c.b16 %v799, %v767
    %v1280 = vpack.c.b16 %v800, %v768
    %v1281 = vpack.c.b16 %v801, %v769
    %v1282 = vpack.c.b16 %v802, %v770
    %v1283 = vpack.c.b16 %v803, %v771
    %v1284 = vpack.c.b16 %v804, %v772
    %v1285 = vpack.c.b16 %v805, %v773
    %v1286 = vpack.c.b16 %v806, %v774
    %v1287 = vpack.c.b16 %v807, %v775
    %v1288 = vpack.c.b16 %v808, %v776
    %v1289 = vpack.c.b16 %v809, %v777
    %v1290 = vpack.c.b16 %v810, %v778
    %v1291 = vpack.c.b16 %v843, %v811
    %v1292 = vpack.c.b16 %v844, %v812
    %v1293 = vpack.c.b16 %v845, %v813
    %v1294 = vpack.c.b16 %v846, %v814
    %v1295 = vpack.c.b16 %v847, %v815
    %v1296 = vpack.c.b16 %v848, %v816
    %v1297 = vpack.c.b16 %v849, %v817
    %v1298 = vpack.c.b16 %v850, %v818
    %v1299 = vpack.c.b16 %v851, %v819
    %v1300 = vpack.c.b16 %v852, %v820
    %v1301 = vpack.c.b16 %v853, %v821
    %v1302 = vpack.c.b16 %v854, %v822
    %v1303 = vpack.c.b16 %v855, %v823
    %v1304 = vpack.c.b16 %v856, %v824
    %v1305 = vpack.c.b16 %v857, %v825
    %v1306 = vpack.c.b16 %v858, %v826
    %v1307 = vpack.c.b16 %v859, %v827
    %v1308 = vpack.c.b16 %v860, %v828
    %v1309 = vpack.c.b16 %v861, %v829
    %v1310 = vpack.c.b16 %v862, %v830
    %v1311 = vpack.c.b16 %v863, %v831
    %v1312 = vpack.c.b16 %v864, %v832
    %v1313 = vpack.c.b16 %v865, %v833
    %v1314 = vpack.c.b16 %v866, %v834
    %v1315 = vpack.c.b16 %v867, %v835
    %v1316 = vpack.c.b16 %v868, %v836
    %v1317 = vpack.c.b16 %v869, %v837
    %v1318 = vpack.c.b16 %v870, %v838
    %v1319 = vpack.c.b16 %v871, %v839
    %v1320 = vpack.c.b16 %v872, %v840
    %v1321 = vpack.c.b16 %v873, %v841
    %v1322 = vpack.c.b16 %v874, %v842
    %v1323 = vpack.c.b16 %v907, %v875
    %v1324 = vpack.c.b16 %v908, %v876
    %v1325 = vpack.c.b16 %v909, %v877
    %v1326 = vpack.c.b16 %v910, %v878
    %v1327 = vpack.c.b16 %v911, %v879
    %v1328 = vpack.c.b16 %v912, %v880
    %v1329 = vpack.c.b16 %v913, %v881
    %v1330 = vpack.c.b16 %v914, %v882
    %v1331 = vpack.c.b16 %v915, %v883
    %v1332 = vpack.c.b16 %v916, %v884
    %v1333 = vpack.c.b16 %v917, %v885
    %v1334 = vpack.c.b16 %v918, %v886
    %v1335 = vpack.c.b16 %v919, %v887
    %v1336 = vpack.c.b16 %v920, %v888
    %v1337 = vpack.c.b16 %v921, %v889
    %v1338 = vpack.c.b16 %v922, %v890
    %v1339 = vpack.c.b16 %v923, %v891
    %v1340 = vpack.c.b16 %v924, %v892
    %v1341 = vpack.c.b16 %v925, %v893
    %v1342 = vpack.c.b16 %v926, %v894
    %v1343 = vpack.c.b16 %v927, %v895
    %v1344 = vpack.c.b16 %v928, %v896
    %v1345 = vpack.c.b16 %v929, %v897
    %v1346 = vpack.c.b16 %v930, %v898
    %v1347 = vpack.c.b16 %v931, %v899
    %v1348 = vpack.c.b16 %v932, %v900
    %v1349 = vpack.c.b16 %v933, %v901
    %v1350 = vpack.c.b16 %v934, %v902
    %v1351 = vpack.c.b16 %v935, %v903
    %v1352 = vpack.c.b16 %v936, %v904
    %v1353 = vpack.c.b16 %v937, %v905
    %v1354 = vpack.c.b16 %v938, %v906
    %v1355 = vpack.c.b16 %v971, %v939
    %v1356 = vpack.c.b16 %v972, %v940
    %v1357 = vpack.c.b16 %v973, %v941
    %v1358 = vpack.c.b16 %v974, %v942
    %v1359 = vpack.c.b16 %v975, %v943
    %v1360 = vpack.c.b16 %v976, %v944
    %v1361 = vpack.c.b16 %v977, %v945
    %v1362 = vpack.c.b16 %v978, %v946
    %v1363 = vpack.c.b16 %v979, %v947
    %v1364 = vpack.c.b16 %v980, %v948
    %v1365 = vpack.c.b16 %v981, %v949
    %v1366 = vpack.c.b16 %v982, %v950
    %v1367 = vpack.c.b16 %v983, %v951
    %v1368 = vpack.c.b16 %v984, %v952
    %v1369 = vpack.c.b16 %v985, %v953
    %v1370 = vpack.c.b16 %v986, %v954
    %v1371 = vpack.c.b16 %v987, %v955
    %v1372 = vpack.c.b16 %v988, %v956
    %v1373 = vpack.c.b16 %v989, %v957
    %v1374 = vpack.c.b16 %v990, %v958
    %v1375 = vpack.c.b16 %v991, %v959
    %v1376 = vpack.c.b16 %v992, %v960
    %v1377 = vpack.c.b16 %v993, %v961
    %v1378 = vpack.c.b16 %v994, %v962
    %v1379 = vpack.c.b16 %v995, %v963
    %v1380 = vpack.c.b16 %v996, %v964
    %v1381 = vpack.c.b16 %v997, %v965
    %v1382 = vpack.c.b16 %v998, %v966
    %v1383 = vpack.c.b16 %v999, %v967
    %v1384 = vpack.c.b16 %v1000, %v968
    %v1385 = vpack.c.b16 %v1001, %v969
    %v1386 = vpack.c.b16 %v1002, %v970
    %v1387 = vpack.c.b16 %v1035, %v1003
    %v1388 = vpack.c.b16 %v1036, %v1004
    %v1389 = vpack.c.b16 %v1037, %v1005
    %v1390 = vpack.c.b16 %v1038, %v1006
    %v1391 = vpack.c.b16 %v1039, %v1007
    %v1392 = vpack.c.b16 %v1040, %v1008
    %v1393 = vpack.c.b16 %v1041, %v1009
    %v1394 = vpack.c.b16 %v1042, %v1010
    %v1395 = vpack.c.b16 %v1043, %v1011
    %v1396 = vpack.c.b16 %v1044, %v1012
    %v1397 = vpack.c.b16 %v1045, %v1013
    %v1398 = vpack.c.b16 %v1046, %v1014
    %v1399 = vpack.c.b16 %v1047, %v1015
    %v1400 = vpack.c.b16 %v1048, %v1016
    %v1401 = vpack.c.b16 %v1049, %v1017
    %v1402 = vpack.c.b16 %v1050, %v1018
    %v1403 = vpack.c.b16 %v1051, %v1019
    %v1404 = vpack.c.b16 %v1052, %v1020
    %v1405 = vpack.c.b16 %v1053, %v1021
    %v1406 = vpack.c.b16 %v1054, %v1022
    %v1407 = vpack.c.b16 %v1055, %v1023
    %v1408 = vpack.c.b16 %v1056, %v1024
    %v1409 = vpack.c.b16 %v1057, %v1025
    %v1410 = vpack.c.b16 %v1058, %v1026
    %v1411 = vpack.c.b16 %v1059, %v1027
    %v1412 = vpack.c.b16 %v1060, %v1028
    %v1413 = vpack.c.b16 %v1061, %v1029
    %v1414 = vpack.c.b16 %v1062, %v1030
    %v1415 = vpack.c.b16 %v1063, %v1031
    %v1416 = vpack.c.b16 %v1064, %v1032
    %v1417 = vpack.c.b16 %v1065, %v1033
    %v1418 = vpack.c.b16 %v1066, %v1034
    %v1419 = vpack.c.b16 %v1099, %v1067
    %v1420 = vpack.c.b16 %v1100, %v1068
    %v1421 = vpack.c.b16 %v1101, %v1069
    %v1422 = vpack.c.b16 %v1102, %v1070
    %v1423 = vpack.c.b16 %v1103, %v1071
    %v1424 = vpack.c.b16 %v1104, %v1072
    %v1425 = vpack.c.b16 %v1105, %v1073
    %v1426 = vpack.c.b16 %v1106, %v1074
    %v1427 = vpack.c.b16 %v1107, %v1075
    %v1428 = vpack.c.b16 %v1108, %v1076
    %v1429 = vpack.c.b16 %v1109, %v1077
    %v1430 = vpack.c.b16 %v1110, %v1078
    %v1431 = vpack.c.b16 %v1111, %v1079
    %v1432 = vpack.c.b16 %v1112, %v1080
    %v1433 = vpack.c.b16 %v1113, %v1081
    %v1434 = vpack.c.b16 %v1114, %v1082
    %v1435 = vpack.c.b16 %v1115, %v1083
    %v1436 = vpack.c.b16 %v1116, %v1084
    %v1437 = vpack.c.b16 %v1117, %v1085
    %v1438 = vpack.c.b16 %v1118, %v1086
    %v1439 = vpack.c.b16 %v1119, %v1087
    %v1440 = vpack.c.b16 %v1120, %v1088
    %v1441 = vpack.c.b16 %v1121, %v1089
    %v1442 = vpack.c.b16 %v1122, %v1090
    %v1443 = vpack.c.b16 %v1123, %v1091
    %v1444 = vpack.c.b16 %v1124, %v1092
    %v1445 = vpack.c.b16 %v1125, %v1093
    %v1446 = vpack.c.b16 %v1126, %v1094
    %v1447 = vpack.c.b16 %v1127, %v1095
    %v1448 = vpack.c.b16 %v1128, %v1096
    %v1449 = vpack.c.b16 %v1129, %v1097
    %v1450 = vpack.c.b16 %v1130, %v1098
    %v1451 = vpack.c.b16 %v1163, %v1131
    %v1452 = vpack.c.b16 %v1164, %v1132
    %v1453 = vpack.c.b16 %v1165, %v1133
    %v1454 = vpack.c.b16 %v1166, %v1134
    %v1455 = vpack.c.b16 %v1167, %v1135
    %v1456 = vpack.c.b16 %v1168, %v1136
    %v1457 = vpack.c.b16 %v1169, %v1137
    %v1458 = vpack.c.b16 %v1170, %v1138
    %v1459 = vpack.c.b16 %v1171, %v1139
    %v1460 = vpack.c.b16 %v1172, %v1140
    %v1461 = vpack.c.b16 %v1173, %v1141
    %v1462 = vpack.c.b16 %v1174, %v1142
    %v1463 = vpack.c.b16 %v1175, %v1143
    %v1464 = vpack.c.b16 %v1176, %v1144
    %v1465 = vpack.c.b16 %v1177, %v1145
    %v1466 = vpack.c.b16 %v1178, %v1146
    %v1467 = vpack.c.b16 %v1179, %v1147
    %v1468 = vpack.c.b16 %v1180, %v1148
    %v1469 = vpack.c.b16 %v1181, %v1149
    %v1470 = vpack.c.b16 %v1182, %v1150
    %v1471 = vpack.c.b16 %v1183, %v1151
    %v1472 = vpack.c.b16 %v1184, %v1152
    %v1473 = vpack.c.b16 %v1185, %v1153
    %v1474 = vpack.c.b16 %v1186, %v1154
    %v1475 = vpack.c.b16 %v1187, %v1155
    %v1476 = vpack.c.b16 %v1188, %v1156
    %v1477 = vpack.c.b16 %v1189, %v1157
    %v1478 = vpack.c.b16 %v1190, %v1158
    %v1479 = vpack.c.b16 %v1191, %v1159
    %v1480 = vpack.c.b16 %v1192, %v1160
    %v1481 = vpack.c.b16 %v1193, %v1161
    %v1482 = vpack.c.b16 %v1194, %v1162
    %v1483 = vpack.c.b16 %v1227, %v1195
    %v1484 = vpack.c.b16 %v1228, %v1196
    %v1485 = vpack.c.b16 %v1229, %v1197
    %v1486 = vpack.c.b16 %v1230, %v1198
    %v1487 = vpack.c.b16 %v1231, %v1199
    %v1488 = vpack.c.b16 %v1232, %v1200
    %v1489 = vpack.c.b16 %v1233, %v1201
    %v1490 = vpack.c.b16 %v1234, %v1202
    %v1491 = vpack.c.b16 %v1235, %v1203
    %v1492 = vpack.c.b16 %v1236, %v1204
    %v1493 = vpack.c.b16 %v1237, %v1205
    %v1494 = vpack.c.b16 %v1238, %v1206
    %v1495 = vpack.c.b16 %v1239, %v1207
    %v1496 = vpack.c.b16 %v1240, %v1208
    %v1497 = vpack.c.b16 %v1241, %v1209
    %v1498 = vpack.c.b16 %v1242, %v1210
    %v1499 = vpack.c.b16 %v1243, %v1211
    %v1500 = vpack.c.b16 %v1244, %v1212
    %v1501 = vpack.c.b16 %v1245, %v1213
    %v1502 = vpack.c.b16 %v1246, %v1214
    %v1503 = vpack.c.b16 %v1247, %v1215
    %v1504 = vpack.c.b16 %v1248, %v1216
    %v1505 = vpack.c.b16 %v1249, %v1217
    %v1506 = vpack.c.b16 %v1250, %v1218
    %v1507 = vpack.c.b16 %v1251, %v1219
    %v1508 = vpack.c.b16 %v1252, %v1220
    %v1509 = vpack.c.b16 %v1253, %v1221
    %v1510 = vpack.c.b16 %v1254, %v1222
    %v1511 = vpack.c.b16 %v1255, %v1223
    %v1512 = vpack.c.b16 %v1256, %v1224
    %v1513 = vpack.c.b16 %v1257, %v1225
    %v1514 = vpack.c.b16 %v1258, %v1226
    %1771 = vmatprep.subr.bf16.mxu0 %v1260
    %1772 = vmatpush1.bf16.msra.mxu0 %v1259
    %1773 = vmatprep.subr.bf16.mxu0 %v1292
    %1774 = vmatpush1.bf16.msra.mxu0 %v1291
    %1775 = vmatprep.subr.bf16.mxu0 %v1324
    %1776 = vmatpush1.bf16.msra.mxu0 %v1323
    %1777 = vmatprep.subr.bf16.mxu0 %v1356
    %1778 = vmatpush1.bf16.msra.mxu0 %v1355
    %1779 = vmatprep.subr.bf16.mxu0 %v1388
    %1780 = vmatpush1.bf16.msra.mxu0 %v1387
    %1781 = vmatprep.subr.bf16.mxu0 %v1420
    %1782 = vmatpush1.bf16.msra.mxu0 %v1419
    %1783 = vmatprep.subr.bf16.mxu0 %v1452
    %1784 = vmatpush1.bf16.msra.mxu0 %v1451
    %1785 = vmatprep.subr.bf16.mxu0 %v1484
    %1786 = vmatpush1.bf16.msra.mxu0 %v1483
    %1787 = vmatprep.subr.bf16.mxu0 0
    %1788 = vmatpush1.bf16.msra.mxu0 0
    %1789 = vmatprep.subr.bf16.mxu0 0
    %1790 = vmatpush1.bf16.msra.mxu0 0
    %1791 = vmatprep.subr.bf16.mxu0 0
    %1792 = vmatpush1.bf16.msra.mxu0 0
    %1793 = vmatprep.subr.bf16.mxu0 0
    %1794 = vmatpush1.bf16.msra.mxu0 0
    %1795 = vmatprep.subr.bf16.mxu0 0
    %1796 = vmatpush1.bf16.msra.mxu0 0
    %1797 = vmatprep.subr.bf16.mxu0 0
    %1798 = vmatpush1.bf16.msra.mxu0 0
    %1799 = vmatprep.subr.bf16.mxu0 0
    %1800 = vmatpush1.bf16.msra.mxu0 0
    %1801 = vmatprep.subr.bf16.mxu0 0
    %1802 = vmatpush1.bf16.msra.mxu0 0
    %1803 = vmatprep.mubr.bf16.mxu0 0
    %1804 = vmatmul.mubr.bf16.gmra.mrb[0].mxu0 %v63
    %v1805 = vpop.f32.mrb[0].mxu0
    %v1806 = vadd.f32 %v334, %v1805
    %v1807 = vpop.f32.mrb[0].mxu0
    %v1808 = vadd.f32 %v338, %v1807
    %v1809 = vpop.f32.mrb[0].mxu0
    %v1810 = vadd.f32 %v334, %v1809
    %v1811 = vpop.f32.mrb[0].mxu0
    %v1812 = vadd.f32 %v338, %v1811
    %1813 = vmatprep.mubr.bf16.mxu0 0
    %1814 = vmatmul.mubr.bf16.gmra.mrb[0].mxu0 %v64
    %v1815 = vpop.f32.mrb[0].mxu0
    %v1816 = vadd.f32 %v334, %v1815
    %v1817 = vpop.f32.mrb[0].mxu0
    %v1818 = vadd.f32 %v338, %v1817
    %v1819 = vpop.f32.mrb[0].mxu0
    %v1820 = vadd.f32 %v334, %v1819
    %v1821 = vpop.f32.mrb[0].mxu0
    %v1822 = vadd.f32 %v338, %v1821
    %1823 = vmatprep.mubr.bf16.mxu0 0
    %1824 = vmatmul.mubr.bf16.gmra.mrb[0].mxu0 %v65
    %v1825 = vpop.f32.mrb[0].mxu0
    %v1826 = vadd.f32 %v334, %v1825
    %v1827 = vpop.f32.mrb[0].mxu0
    %v1828 = vadd.f32 %v338, %v1827
    %v1829 = vpop.f32.mrb[0].mxu0
    %v1830 = vadd.f32 %v334, %v1829
    %v1831 = vpop.f32.mrb[0].mxu0
    %v1832 = vadd.f32 %v338, %v1831
    %1833 = vmatprep.mubr.bf16.mxu0 0
    %1834 = vmatmul.mubr.bf16.gmra.mrb[0].mxu0 %v66
    %v1835 = vpop.f32.mrb[0].mxu0
    %v1836 = vadd.f32 %v334, %v1835
    %v1837 = vpop.f32.mrb[0].mxu0
    %v1838 = vadd.f32 %v338, %v1837
    %v1839 = vpop.f32.mrb[0].mxu0
    %v1840 = vadd.f32 %v334, %v1839
    %v1841 = vpop.f32.mrb[0].mxu0
    %v1842 = vadd.f32 %v338, %v1841
    %1843 = vdwg.mxu0
    %1844 = vmatprep.subr.bf16.mxu0 %v1262
    %1845 = vmatpush1.bf16.msra.mxu0 %v1261
    %1846 = vmatprep.subr.bf16.mxu0 %v1294
    %1847 = vmatpush1.bf16.msra.mxu0 %v1293
    %1848 = vmatprep.subr.bf16.mxu0 %v1326
    %1849 = vmatpush1.bf16.msra.mxu0 %v1325
    %1850 = vmatprep.subr.bf16.mxu0 %v1358
    %1851 = vmatpush1.bf16.msra.mxu0 %v1357
    %1852 = vmatprep.subr.bf16.mxu0 %v1390
    %1853 = vmatpush1.bf16.msra.mxu0 %v1389
    %1854 = vmatprep.subr.bf16.mxu0 %v1422
    %1855 = vmatpush1.bf16.msra.mxu0 %v1421
    %1856 = vmatprep.subr.bf16.mxu0 %v1454
    %1857 = vmatpush1.bf16.msra.mxu0 %v1453
    %1858 = vmatprep.subr.bf16.mxu0 %v1486
    %1859 = vmatpush1.bf16.msra.mxu0 %v1485
    %1860 = vmatprep.subr.bf16.mxu0 0
    %1861 = vmatpush1.bf16.msra.mxu0 0
    %1862 = vmatprep.subr.bf16.mxu0 0
    %1863 = vmatpush1.bf16.msra.mxu0 0
    %1864 = vmatprep.subr.bf16.mxu0 0
    %1865 = vmatpush1.bf16.msra.mxu0 0
    %1866 = vmatprep.subr.bf16.mxu0 0
    %1867 = vmatpush1.bf16.msra.mxu0 0
    %1868 = vmatprep.subr.bf16.mxu0 0
    %1869 = vmatpush1.bf16.msra.mxu0 0
    %1870 = vmatprep.subr.bf16.mxu0 0
    %1871 = vmatpush1.bf16.msra.mxu0 0
    %1872 = vmatprep.subr.bf16.mxu0 0
    %1873 = vmatpush1.bf16.msra.mxu0 0
    %1874 = vmatprep.subr.bf16.mxu0 0
    %1875 = vmatpush1.bf16.msra.mxu0 0
    %1876 = vmatprep.mubr.bf16.mxu0 0
    %1877 = vmatmul.mubr.bf16.gmra.mrb[0].mxu0 %v63
    %v1878 = vpop.f32.mrb[0].mxu0
    %v1879 = vadd.f32 %v342, %v1878
    %v1880 = vpop.f32.mrb[0].mxu0
    %v1881 = vadd.f32 %v346, %v1880
    %v1882 = vpop.f32.mrb[0].mxu0
    %v1883 = vadd.f32 %v342, %v1882
    %v1884 = vpop.f32.mrb[0].mxu0
    %v1885 = vadd.f32 %v346, %v1884
    %1886 = vmatprep.mubr.bf16.mxu0 0
    %1887 = vmatmul.mubr.bf16.gmra.mrb[0].mxu0 %v64
    %v1888 = vpop.f32.mrb[0].mxu0
    %v1889 = vadd.f32 %v342, %v1888
    %v1890 = vpop.f32.mrb[0].mxu0
    %v1891 = vadd.f32 %v346, %v1890
    %v1892 = vpop.f32.mrb[0].mxu0
    %v1893 = vadd.f32 %v342, %v1892
    %v1894 = vpop.f32.mrb[0].mxu0
    %v1895 = vadd.f32 %v346, %v1894
    %1896 = vmatprep.mubr.bf16.mxu0 0
    %1897 = vmatmul.mubr.bf16.gmra.mrb[0].mxu0 %v65
    %v1898 = vpop.f32.mrb[0].mxu0
    %v1899 = vadd.f32 %v342, %v1898
    %v1900 = vpop.f32.mrb[0].mxu0
    %v1901 = vadd.f32 %v346, %v1900
    %v1902 = vpop.f32.mrb[0].mxu0
    %v1903 = vadd.f32 %v342, %v1902
    %v1904 = vpop.f32.mrb[0].mxu0
    %v1905 = vadd.f32 %v346, %v1904
    %1906 = vmatprep.mubr.bf16.mxu0 0
    %1907 = vmatmul.mubr.bf16.gmra.mrb[0].mxu0 %v66
    %v1908 = vpop.f32.mrb[0].mxu0
    %v1909 = vadd.f32 %v342, %v1908
    %v1910 = vpop.f32.mrb[0].mxu0
    %v1911 = vadd.f32 %v346, %v1910
    %v1912 = vpop.f32.mrb[0].mxu0
    %v1913 = vadd.f32 %v342, %v1912
    %v1914 = vpop.f32.mrb[0].mxu0
    %v1915 = vadd.f32 %v346, %v1914
    %1916 = vdwg.mxu0
    %1917 = vmatprep.subr.bf16.mxu0 %v1264
    %1918 = vmatpush1.bf16.msra.mxu0 %v1263
    %1919 = vmatprep.subr.bf16.mxu0 %v1296
    %1920 = vmatpush1.bf16.msra.mxu0 %v1295
    %1921 = vmatprep.subr.bf16.mxu0 %v1328
    %1922 = vmatpush1.bf16.msra.mxu0 %v1327
    %1923 = vmatprep.subr.bf16.mxu0 %v1360
    %1924 = vmatpush1.bf16.msra.mxu0 %v1359
    %1925 = vmatprep.subr.bf16.mxu0 %v1392
    %1926 = vmatpush1.bf16.msra.mxu0 %v1391
    %1927 = vmatprep.subr.bf16.mxu0 %v1424
    %1928 = vmatpush1.bf16.msra.mxu0 %v1423
    %1929 = vmatprep.subr.bf16.mxu0 %v1456
    %1930 = vmatpush1.bf16.msra.mxu0 %v1455
    %1931 = vmatprep.subr.bf16.mxu0 %v1488
    %1932 = vmatpush1.bf16.msra.mxu0 %v1487
    %1933 = vmatprep.subr.bf16.mxu0 0
    %1934 = vmatpush1.bf16.msra.mxu0 0
    %1935 = vmatprep.subr.bf16.mxu0 0
    %1936 = vmatpush1.bf16.msra.mxu0 0
    %1937 = vmatprep.subr.bf16.mxu0 0
    %1938 = vmatpush1.bf16.msra.mxu0 0
    %1939 = vmatprep.subr.bf16.mxu0 0
    %1940 = vmatpush1.bf16.msra.mxu0 0
    %1941 = vmatprep.subr.bf16.mxu0 0
    %1942 = vmatpush1.bf16.msra.mxu0 0
    %1943 = vmatprep.subr.bf16.mxu0 0
    %1944 = vmatpush1.bf16.msra.mxu0 0
    %1945 = vmatprep.subr.bf16.mxu0 0
    %1946 = vmatpush1.bf16.msra.mxu0 0
    %1947 = vmatprep.subr.bf16.mxu0 0
    %1948 = vmatpush1.bf16.msra.mxu0 0
    %1949 = vmatprep.mubr.bf16.mxu0 0
    %1950 = vmatmul.mubr.bf16.gmra.mrb[0].mxu0 %v63
    %v1951 = vpop.f32.mrb[0].mxu0
    %v1952 = vadd.f32 %v350, %v1951
    %v1953 = vpop.f32.mrb[0].mxu0
    %v1954 = vadd.f32 %v354, %v1953
    %v1955 = vpop.f32.mrb[0].mxu0
    %v1956 = vadd.f32 %v350, %v1955
    %v1957 = vpop.f32.mrb[0].mxu0
    %v1958 = vadd.f32 %v354, %v1957
    %1959 = vmatprep.mubr.bf16.mxu0 0
    %1960 = vmatmul.mubr.bf16.gmra.mrb[0].mxu0 %v64
    %v1961 = vpop.f32.mrb[0].mxu0
    %v1962 = vadd.f32 %v350, %v1961
    %v1963 = vpop.f32.mrb[0].mxu0
    %v1964 = vadd.f32 %v354, %v1963
    %v1965 = vpop.f32.mrb[0].mxu0
    %v1966 = vadd.f32 %v350, %v1965
    %v1967 = vpop.f32.mrb[0].mxu0
    %v1968 = vadd.f32 %v354, %v1967
    %1969 = vmatprep.mubr.bf16.mxu0 0
    %1970 = vmatmul.mubr.bf16.gmra.mrb[0].mxu0 %v65
    %v1971 = vpop.f32.mrb[0].mxu0
    %v1972 = vadd.f32 %v350, %v1971
    %v1973 = vpop.f32.mrb[0].mxu0
    %v1974 = vadd.f32 %v354, %v1973
    %v1975 = vpop.f32.mrb[0].mxu0
    %v1976 = vadd.f32 %v350, %v1975
    %v1977 = vpop.f32.mrb[0].mxu0
    %v1978 = vadd.f32 %v354, %v1977
    %1979 = vmatprep.mubr.bf16.mxu0 0
    %1980 = vmatmul.mubr.bf16.gmra.mrb[0].mxu0 %v66
    %v1981 = vpop.f32.mrb[0].mxu0
    %v1982 = vadd.f32 %v350, %v1981
    %v1983 = vpop.f32.mrb[0].mxu0
    %v1984 = vadd.f32 %v354, %v1983
    %v1985 = vpop.f32.mrb[0].mxu0
    %v1986 = vadd.f32 %v350, %v1985
    %v1987 = vpop.f32.mrb[0].mxu0
    %v1988 = vadd.f32 %v354, %v1987
    %1989 = vdwg.mxu0
    %1990 = vmatprep.subr.bf16.mxu0 %v1266
    %1991 = vmatpush1.bf16.msra.mxu0 %v1265
    %1992 = vmatprep.subr.bf16.mxu0 %v1298
    %1993 = vmatpush1.bf16.msra.mxu0 %v1297
    %1994 = vmatprep.subr.bf16.mxu0 %v1330
    %1995 = vmatpush1.bf16.msra.mxu0 %v1329
    %1996 = vmatprep.subr.bf16.mxu0 %v1362
    %1997 = vmatpush1.bf16.msra.mxu0 %v1361
    %1998 = vmatprep.subr.bf16.mxu0 %v1394
    %1999 = vmatpush1.bf16.msra.mxu0 %v1393
    %2000 = vmatprep.subr.bf16.mxu0 %v1426
    %2001 = vmatpush1.bf16.msra.mxu0 %v1425
    %2002 = vmatprep.subr.bf16.mxu0 %v1458
    %2003 = vmatpush1.bf16.msra.mxu0 %v1457
    %2004 = vmatprep.subr.bf16.mxu0 %v1490
    %2005 = vmatpush1.bf16.msra.mxu0 %v1489
    %2006 = vmatprep.subr.bf16.mxu0 0
    %2007 = vmatpush1.bf16.msra.mxu0 0
    %2008 = vmatprep.subr.bf16.mxu0 0
    %2009 = vmatpush1.bf16.msra.mxu0 0
    %2010 = vmatprep.subr.bf16.mxu0 0
    %2011 = vmatpush1.bf16.msra.mxu0 0
    %2012 = vmatprep.subr.bf16.mxu0 0
    %2013 = vmatpush1.bf16.msra.mxu0 0
    %2014 = vmatprep.subr.bf16.mxu0 0
    %2015 = vmatpush1.bf16.msra.mxu0 0
    %2016 = vmatprep.subr.bf16.mxu0 0
    %2017 = vmatpush1.bf16.msra.mxu0 0
    %2018 = vmatprep.subr.bf16.mxu0 0
    %2019 = vmatpush1.bf16.msra.mxu0 0
    %2020 = vmatprep.subr.bf16.mxu0 0
    %2021 = vmatpush1.bf16.msra.mxu0 0
    %2022 = vmatprep.mubr.bf16.mxu0 0
    %2023 = vmatmul.mubr.bf16.gmra.mrb[0].mxu0 %v63
    %v2024 = vpop.f32.mrb[0].mxu0
    %v2025 = vadd.f32 %v358, %v2024
    %v2026 = vpop.f32.mrb[0].mxu0
    %v2027 = vadd.f32 %v362, %v2026
    %v2028 = vpop.f32.mrb[0].mxu0
    %v2029 = vadd.f32 %v358, %v2028
    %v2030 = vpop.f32.mrb[0].mxu0
    %v2031 = vadd.f32 %v362, %v2030
    %2032 = vmatprep.mubr.bf16.mxu0 0
    %2033 = vmatmul.mubr.bf16.gmra.mrb[0].mxu0 %v64
    %v2034 = vpop.f32.mrb[0].mxu0
    %v2035 = vadd.f32 %v358, %v2034
    %v2036 = vpop.f32.mrb[0].mxu0
    %v2037 = vadd.f32 %v362, %v2036
    %v2038 = vpop.f32.mrb[0].mxu0
    %v2039 = vadd.f32 %v358, %v2038
    %v2040 = vpop.f32.mrb[0].mxu0
    %v2041 = vadd.f32 %v362, %v2040
    %2042 = vmatprep.mubr.bf16.mxu0 0
    %2043 = vmatmul.mubr.bf16.gmra.mrb[0].mxu0 %v65
    %v2044 = vpop.f32.mrb[0].mxu0
    %v2045 = vadd.f32 %v358, %v2044
    %v2046 = vpop.f32.mrb[0].mxu0
    %v2047 = vadd.f32 %v362, %v2046
    %v2048 = vpop.f32.mrb[0].mxu0
    %v2049 = vadd.f32 %v358, %v2048
    %v2050 = vpop.f32.mrb[0].mxu0
    %v2051 = vadd.f32 %v362, %v2050
    %2052 = vmatprep.mubr.bf16.mxu0 0
    %2053 = vmatmul.mubr.bf16.gmra.mrb[0].mxu0 %v66
    %v2054 = vpop.f32.mrb[0].mxu0
    %v2055 = vadd.f32 %v358, %v2054
    %v2056 = vpop.f32.mrb[0].mxu0
    %v2057 = vadd.f32 %v362, %v2056
    %v2058 = vpop.f32.mrb[0].mxu0
    %v2059 = vadd.f32 %v358, %v2058
    %v2060 = vpop.f32.mrb[0].mxu0
    %v2061 = vadd.f32 %v362, %v2060
    %2062 = vdwg.mxu0
    %2063 = vmatprep.subr.bf16.mxu0 %v1268
    %2064 = vmatpush1.bf16.msra.mxu0 %v1267
    %2065 = vmatprep.subr.bf16.mxu0 %v1300
    %2066 = vmatpush1.bf16.msra.mxu0 %v1299
    %2067 = vmatprep.subr.bf16.mxu0 %v1332
    %2068 = vmatpush1.bf16.msra.mxu0 %v1331
    %2069 = vmatprep.subr.bf16.mxu0 %v1364
    %2070 = vmatpush1.bf16.msra.mxu0 %v1363
    %2071 = vmatprep.subr.bf16.mxu0 %v1396
    %2072 = vmatpush1.bf16.msra.mxu0 %v1395
    %2073 = vmatprep.subr.bf16.mxu0 %v1428
    %2074 = vmatpush1.bf16.msra.mxu0 %v1427
    %2075 = vmatprep.subr.bf16.mxu0 %v1460
    %2076 = vmatpush1.bf16.msra.mxu0 %v1459
    %2077 = vmatprep.subr.bf16.mxu0 %v1492
    %2078 = vmatpush1.bf16.msra.mxu0 %v1491
    %2079 = vmatprep.subr.bf16.mxu0 0
    %2080 = vmatpush1.bf16.msra.mxu0 0
    %2081 = vmatprep.subr.bf16.mxu0 0
    %2082 = vmatpush1.bf16.msra.mxu0 0
    %2083 = vmatprep.subr.bf16.mxu0 0
    %2084 = vmatpush1.bf16.msra.mxu0 0
    %2085 = vmatprep.subr.bf16.mxu0 0
    %2086 = vmatpush1.bf16.msra.mxu0 0
    %2087 = vmatprep.subr.bf16.mxu0 0
    %2088 = vmatpush1.bf16.msra.mxu0 0
    %2089 = vmatprep.subr.bf16.mxu0 0
    %2090 = vmatpush1.bf16.msra.mxu0 0
    %2091 = vmatprep.subr.bf16.mxu0 0
    %2092 = vmatpush1.bf16.msra.mxu0 0
    %2093 = vmatprep.subr.bf16.mxu0 0
    %2094 = vmatpush1.bf16.msra.mxu0 0
    %2095 = vmatprep.mubr.bf16.mxu0 0
    %2096 = vmatmul.mubr.bf16.gmra.mrb[0].mxu0 %v63
    %v2097 = vpop.f32.mrb[0].mxu0
    %v2098 = vadd.f32 %v366, %v2097
    %v2099 = vpop.f32.mrb[0].mxu0
    %v2100 = vadd.f32 %v370, %v2099
    %v2101 = vpop.f32.mrb[0].mxu0
    %v2102 = vadd.f32 %v366, %v2101
    %v2103 = vpop.f32.mrb[0].mxu0
    %v2104 = vadd.f32 %v370, %v2103
    %2105 = vmatprep.mubr.bf16.mxu0 0
    %2106 = vmatmul.mubr.bf16.gmra.mrb[0].mxu0 %v64
    %v2107 = vpop.f32.mrb[0].mxu0
    %v2108 = vadd.f32 %v366, %v2107
    %v2109 = vpop.f32.mrb[0].mxu0
    %v2110 = vadd.f32 %v370, %v2109
    %v2111 = vpop.f32.mrb[0].mxu0
    %v2112 = vadd.f32 %v366, %v2111
    %v2113 = vpop.f32.mrb[0].mxu0
    %v2114 = vadd.f32 %v370, %v2113
    %2115 = vmatprep.mubr.bf16.mxu0 0
    %2116 = vmatmul.mubr.bf16.gmra.mrb[0].mxu0 %v65
    %v2117 = vpop.f32.mrb[0].mxu0
    %v2118 = vadd.f32 %v366, %v2117
    %v2119 = vpop.f32.mrb[0].mxu0
    %v2120 = vadd.f32 %v370, %v2119
    %v2121 = vpop.f32.mrb[0].mxu0
    %v2122 = vadd.f32 %v366, %v2121
    %v2123 = vpop.f32.mrb[0].mxu0
    %v2124 = vadd.f32 %v370, %v2123
    %2125 = vmatprep.mubr.bf16.mxu0 0
    %2126 = vmatmul.mubr.bf16.gmra.mrb[0].mxu0 %v66
    %v2127 = vpop.f32.mrb[0].mxu0
    %v2128 = vadd.f32 %v366, %v2127
    %v2129 = vpop.f32.mrb[0].mxu0
    %v2130 = vadd.f32 %v370, %v2129
    %v2131 = vpop.f32.mrb[0].mxu0
    %v2132 = vadd.f32 %v366, %v2131
    %v2133 = vpop.f32.mrb[0].mxu0
    %v2134 = vadd.f32 %v370, %v2133
    %2135 = vdwg.mxu0
    %2136 = vmatprep.subr.bf16.mxu0 %v1270
    %2137 = vmatpush1.bf16.msra.mxu0 %v1269
    %2138 = vmatprep.subr.bf16.mxu0 %v1302
    %2139 = vmatpush1.bf16.msra.mxu0 %v1301
    %2140 = vmatprep.subr.bf16.mxu0 %v1334
    %2141 = vmatpush1.bf16.msra.mxu0 %v1333
    %2142 = vmatprep.subr.bf16.mxu0 %v1366
    %2143 = vmatpush1.bf16.msra.mxu0 %v1365
    %2144 = vmatprep.subr.bf16.mxu0 %v1398
    %2145 = vmatpush1.bf16.msra.mxu0 %v1397
    %2146 = vmatprep.subr.bf16.mxu0 %v1430
    %2147 = vmatpush1.bf16.msra.mxu0 %v1429
    %2148 = vmatprep.subr.bf16.mxu0 %v1462
    %2149 = vmatpush1.bf16.msra.mxu0 %v1461
    %2150 = vmatprep.subr.bf16.mxu0 %v1494
    %2151 = vmatpush1.bf16.msra.mxu0 %v1493
    %2152 = vmatprep.subr.bf16.mxu0 0
    %2153 = vmatpush1.bf16.msra.mxu0 0
    %2154 = vmatprep.subr.bf16.mxu0 0
    %2155 = vmatpush1.bf16.msra.mxu0 0
    %2156 = vmatprep.subr.bf16.mxu0 0
    %2157 = vmatpush1.bf16.msra.mxu0 0
    %2158 = vmatprep.subr.bf16.mxu0 0
    %2159 = vmatpush1.bf16.msra.mxu0 0
    %2160 = vmatprep.subr.bf16.mxu0 0
    %2161 = vmatpush1.bf16.msra.mxu0 0
    %2162 = vmatprep.subr.bf16.mxu0 0
    %2163 = vmatpush1.bf16.msra.mxu0 0
    %2164 = vmatprep.subr.bf16.mxu0 0
    %2165 = vmatpush1.bf16.msra.mxu0 0
    %2166 = vmatprep.subr.bf16.mxu0 0
    %2167 = vmatpush1.bf16.msra.mxu0 0
    %2168 = vmatprep.mubr.bf16.mxu0 0
    %2169 = vmatmul.mubr.bf16.gmra.mrb[0].mxu0 %v63
    %v2170 = vpop.f32.mrb[0].mxu0
    %v2171 = vadd.f32 %v374, %v2170
    %v2172 = vpop.f32.mrb[0].mxu0
    %v2173 = vadd.f32 %v378, %v2172
    %v2174 = vpop.f32.mrb[0].mxu0
    %v2175 = vadd.f32 %v374, %v2174
    %v2176 = vpop.f32.mrb[0].mxu0
    %v2177 = vadd.f32 %v378, %v2176
    %2178 = vmatprep.mubr.bf16.mxu0 0
    %2179 = vmatmul.mubr.bf16.gmra.mrb[0].mxu0 %v64
    %v2180 = vpop.f32.mrb[0].mxu0
    %v2181 = vadd.f32 %v374, %v2180
    %v2182 = vpop.f32.mrb[0].mxu0
    %v2183 = vadd.f32 %v378, %v2182
    %v2184 = vpop.f32.mrb[0].mxu0
    %v2185 = vadd.f32 %v374, %v2184
    %v2186 = vpop.f32.mrb[0].mxu0
    %v2187 = vadd.f32 %v378, %v2186
    %2188 = vmatprep.mubr.bf16.mxu0 0
    %2189 = vmatmul.mubr.bf16.gmra.mrb[0].mxu0 %v65
    %v2190 = vpop.f32.mrb[0].mxu0
    %v2191 = vadd.f32 %v374, %v2190
    %v2192 = vpop.f32.mrb[0].mxu0
    %v2193 = vadd.f32 %v378, %v2192
    %v2194 = vpop.f32.mrb[0].mxu0
    %v2195 = vadd.f32 %v374, %v2194
    %v2196 = vpop.f32.mrb[0].mxu0
    %v2197 = vadd.f32 %v378, %v2196
    %2198 = vmatprep.mubr.bf16.mxu0 0
    %2199 = vmatmul.mubr.bf16.gmra.mrb[0].mxu0 %v66
    %v2200 = vpop.f32.mrb[0].mxu0
    %v2201 = vadd.f32 %v374, %v2200
    %v2202 = vpop.f32.mrb[0].mxu0
    %v2203 = vadd.f32 %v378, %v2202
    %v2204 = vpop.f32.mrb[0].mxu0
    %v2205 = vadd.f32 %v374, %v2204
    %v2206 = vpop.f32.mrb[0].mxu0
    %v2207 = vadd.f32 %v378, %v2206
    %2208 = vdwg.mxu0
    %2209 = vmatprep.subr.bf16.mxu0 %v1272
    %2210 = vmatpush1.bf16.msra.mxu0 %v1271
    %2211 = vmatprep.subr.bf16.mxu0 %v1304
    %2212 = vmatpush1.bf16.msra.mxu0 %v1303
    %2213 = vmatprep.subr.bf16.mxu0 %v1336
    %2214 = vmatpush1.bf16.msra.mxu0 %v1335
    %2215 = vmatprep.subr.bf16.mxu0 %v1368
    %2216 = vmatpush1.bf16.msra.mxu0 %v1367
    %2217 = vmatprep.subr.bf16.mxu0 %v1400
    %2218 = vmatpush1.bf16.msra.mxu0 %v1399
    %2219 = vmatprep.subr.bf16.mxu0 %v1432
    %2220 = vmatpush1.bf16.msra.mxu0 %v1431
    %2221 = vmatprep.subr.bf16.mxu0 %v1464
    %2222 = vmatpush1.bf16.msra.mxu0 %v1463
    %2223 = vmatprep.subr.bf16.mxu0 %v1496
    %2224 = vmatpush1.bf16.msra.mxu0 %v1495
    %2225 = vmatprep.subr.bf16.mxu0 0
    %2226 = vmatpush1.bf16.msra.mxu0 0
    %2227 = vmatprep.subr.bf16.mxu0 0
    %2228 = vmatpush1.bf16.msra.mxu0 0
    %2229 = vmatprep.subr.bf16.mxu0 0
    %2230 = vmatpush1.bf16.msra.mxu0 0
    %2231 = vmatprep.subr.bf16.mxu0 0
    %2232 = vmatpush1.bf16.msra.mxu0 0
    %2233 = vmatprep.subr.bf16.mxu0 0
    %2234 = vmatpush1.bf16.msra.mxu0 0
    %2235 = vmatprep.subr.bf16.mxu0 0
    %2236 = vmatpush1.bf16.msra.mxu0 0
    %2237 = vmatprep.subr.bf16.mxu0 0
    %2238 = vmatpush1.bf16.msra.mxu0 0
    %2239 = vmatprep.subr.bf16.mxu0 0
    %2240 = vmatpush1.bf16.msra.mxu0 0
    %2241 = vmatprep.mubr.bf16.mxu0 0
    %2242 = vmatmul.mubr.bf16.gmra.mrb[0].mxu0 %v63
    %v2243 = vpop.f32.mrb[0].mxu0
    %v2244 = vadd.f32 %v382, %v2243
    %v2245 = vpop.f32.mrb[0].mxu0
    %v2246 = vadd.f32 %v386, %v2245
    %v2247 = vpop.f32.mrb[0].mxu0
    %v2248 = vadd.f32 %v382, %v2247
    %v2249 = vpop.f32.mrb[0].mxu0
    %v2250 = vadd.f32 %v386, %v2249
    %2251 = vmatprep.mubr.bf16.mxu0 0
    %2252 = vmatmul.mubr.bf16.gmra.mrb[0].mxu0 %v64
    %v2253 = vpop.f32.mrb[0].mxu0
    %v2254 = vadd.f32 %v382, %v2253
    %v2255 = vpop.f32.mrb[0].mxu0
    %v2256 = vadd.f32 %v386, %v2255
    %v2257 = vpop.f32.mrb[0].mxu0
    %v2258 = vadd.f32 %v382, %v2257
    %v2259 = vpop.f32.mrb[0].mxu0
    %v2260 = vadd.f32 %v386, %v2259
    %2261 = vmatprep.mubr.bf16.mxu0 0
    %2262 = vmatmul.mubr.bf16.gmra.mrb[0].mxu0 %v65
    %v2263 = vpop.f32.mrb[0].mxu0
    %v2264 = vadd.f32 %v382, %v2263
    %v2265 = vpop.f32.mrb[0].mxu0
    %v2266 = vadd.f32 %v386, %v2265
    %v2267 = vpop.f32.mrb[0].mxu0
    %v2268 = vadd.f32 %v382, %v2267
    %v2269 = vpop.f32.mrb[0].mxu0
    %v2270 = vadd.f32 %v386, %v2269
    %2271 = vmatprep.mubr.bf16.mxu0 0
    %2272 = vmatmul.mubr.bf16.gmra.mrb[0].mxu0 %v66
    %v2273 = vpop.f32.mrb[0].mxu0
    %v2274 = vadd.f32 %v382, %v2273
    %v2275 = vpop.f32.mrb[0].mxu0
    %v2276 = vadd.f32 %v386, %v2275
    %v2277 = vpop.f32.mrb[0].mxu0
    %v2278 = vadd.f32 %v382, %v2277
    %v2279 = vpop.f32.mrb[0].mxu0
    %v2280 = vadd.f32 %v386, %v2279
    %2281 = vdwg.mxu0
    %2282 = vmatprep.subr.bf16.mxu0 %v1274
    %2283 = vmatpush1.bf16.msra.mxu0 %v1273
    %2284 = vmatprep.subr.bf16.mxu0 %v1306
    %2285 = vmatpush1.bf16.msra.mxu0 %v1305
    %2286 = vmatprep.subr.bf16.mxu0 %v1338
    %2287 = vmatpush1.bf16.msra.mxu0 %v1337
    %2288 = vmatprep.subr.bf16.mxu0 %v1370
    %2289 = vmatpush1.bf16.msra.mxu0 %v1369
    %2290 = vmatprep.subr.bf16.mxu0 %v1402
    %2291 = vmatpush1.bf16.msra.mxu0 %v1401
    %2292 = vmatprep.subr.bf16.mxu0 %v1434
    %2293 = vmatpush1.bf16.msra.mxu0 %v1433
    %2294 = vmatprep.subr.bf16.mxu0 %v1466
    %2295 = vmatpush1.bf16.msra.mxu0 %v1465
    %2296 = vmatprep.subr.bf16.mxu0 %v1498
    %2297 = vmatpush1.bf16.msra.mxu0 %v1497
    %2298 = vmatprep.subr.bf16.mxu0 0
    %2299 = vmatpush1.bf16.msra.mxu0 0
    %2300 = vmatprep.subr.bf16.mxu0 0
    %2301 = vmatpush1.bf16.msra.mxu0 0
    %2302 = vmatprep.subr.bf16.mxu0 0
    %2303 = vmatpush1.bf16.msra.mxu0 0
    %2304 = vmatprep.subr.bf16.mxu0 0
    %2305 = vmatpush1.bf16.msra.mxu0 0
    %2306 = vmatprep.subr.bf16.mxu0 0
    %2307 = vmatpush1.bf16.msra.mxu0 0
    %2308 = vmatprep.subr.bf16.mxu0 0
    %2309 = vmatpush1.bf16.msra.mxu0 0
    %2310 = vmatprep.subr.bf16.mxu0 0
    %2311 = vmatpush1.bf16.msra.mxu0 0
    %2312 = vmatprep.subr.bf16.mxu0 0
    %2313 = vmatpush1.bf16.msra.mxu0 0
    %2314 = vmatprep.mubr.bf16.mxu0 0
    %2315 = vmatmul.mubr.bf16.gmra.mrb[0].mxu0 %v63
    %v2316 = vpop.f32.mrb[0].mxu0
    %v2317 = vadd.f32 %v390, %v2316
    %v2318 = vpop.f32.mrb[0].mxu0
    %v2319 = vadd.f32 %v394, %v2318
    %v2320 = vpop.f32.mrb[0].mxu0
    %v2321 = vadd.f32 %v390, %v2320
    %v2322 = vpop.f32.mrb[0].mxu0
    %v2323 = vadd.f32 %v394, %v2322
    %2324 = vmatprep.mubr.bf16.mxu0 0
    %2325 = vmatmul.mubr.bf16.gmra.mrb[0].mxu0 %v64
    %v2326 = vpop.f32.mrb[0].mxu0
    %v2327 = vadd.f32 %v390, %v2326
    %v2328 = vpop.f32.mrb[0].mxu0
    %v2329 = vadd.f32 %v394, %v2328
    %v2330 = vpop.f32.mrb[0].mxu0
    %v2331 = vadd.f32 %v390, %v2330
    %v2332 = vpop.f32.mrb[0].mxu0
    %v2333 = vadd.f32 %v394, %v2332
    %2334 = vmatprep.mubr.bf16.mxu0 0
    %2335 = vmatmul.mubr.bf16.gmra.mrb[0].mxu0 %v65
    %v2336 = vpop.f32.mrb[0].mxu0
    %v2337 = vadd.f32 %v390, %v2336
    %v2338 = vpop.f32.mrb[0].mxu0
    %v2339 = vadd.f32 %v394, %v2338
    %v2340 = vpop.f32.mrb[0].mxu0
    %v2341 = vadd.f32 %v390, %v2340
    %v2342 = vpop.f32.mrb[0].mxu0
    %v2343 = vadd.f32 %v394, %v2342
    %2344 = vmatprep.mubr.bf16.mxu0 0
    %2345 = vmatmul.mubr.bf16.gmra.mrb[0].mxu0 %v66
    %v2346 = vpop.f32.mrb[0].mxu0
    %v2347 = vadd.f32 %v390, %v2346
    %v2348 = vpop.f32.mrb[0].mxu0
    %v2349 = vadd.f32 %v394, %v2348
    %v2350 = vpop.f32.mrb[0].mxu0
    %v2351 = vadd.f32 %v390, %v2350
    %v2352 = vpop.f32.mrb[0].mxu0
    %v2353 = vadd.f32 %v394, %v2352
    %2354 = vdwg.mxu0
    %2355 = vmatprep.subr.bf16.mxu0 %v1276
    %2356 = vmatpush1.bf16.msra.mxu0 %v1275
    %2357 = vmatprep.subr.bf16.mxu0 %v1308
    %2358 = vmatpush1.bf16.msra.mxu0 %v1307
    %2359 = vmatprep.subr.bf16.mxu0 %v1340
    %2360 = vmatpush1.bf16.msra.mxu0 %v1339
    %2361 = vmatprep.subr.bf16.mxu0 %v1372
    %2362 = vmatpush1.bf16.msra.mxu0 %v1371
    %2363 = vmatprep.subr.bf16.mxu0 %v1404
    %2364 = vmatpush1.bf16.msra.mxu0 %v1403
    %2365 = vmatprep.subr.bf16.mxu0 %v1436
    %2366 = vmatpush1.bf16.msra.mxu0 %v1435
    %2367 = vmatprep.subr.bf16.mxu0 %v1468
    %2368 = vmatpush1.bf16.msra.mxu0 %v1467
    %2369 = vmatprep.subr.bf16.mxu0 %v1500
    %2370 = vmatpush1.bf16.msra.mxu0 %v1499
    %2371 = vmatprep.subr.bf16.mxu0 0
    %2372 = vmatpush1.bf16.msra.mxu0 0
    %2373 = vmatprep.subr.bf16.mxu0 0
    %2374 = vmatpush1.bf16.msra.mxu0 0
    %2375 = vmatprep.subr.bf16.mxu0 0
    %2376 = vmatpush1.bf16.msra.mxu0 0
    %2377 = vmatprep.subr.bf16.mxu0 0
    %2378 = vmatpush1.bf16.msra.mxu0 0
    %2379 = vmatprep.subr.bf16.mxu0 0
    %2380 = vmatpush1.bf16.msra.mxu0 0
    %2381 = vmatprep.subr.bf16.mxu0 0
    %2382 = vmatpush1.bf16.msra.mxu0 0
    %2383 = vmatprep.subr.bf16.mxu0 0
    %2384 = vmatpush1.bf16.msra.mxu0 0
    %2385 = vmatprep.subr.bf16.mxu0 0
    %2386 = vmatpush1.bf16.msra.mxu0 0
    %2387 = vmatprep.mubr.bf16.mxu0 0
    %2388 = vmatmul.mubr.bf16.gmra.mrb[0].mxu0 %v63
    %v2389 = vpop.f32.mrb[0].mxu0
    %v2390 = vadd.f32 %v398, %v2389
    %v2391 = vpop.f32.mrb[0].mxu0
    %v2392 = vadd.f32 %v402, %v2391
    %v2393 = vpop.f32.mrb[0].mxu0
    %v2394 = vadd.f32 %v398, %v2393
    %v2395 = vpop.f32.mrb[0].mxu0
    %v2396 = vadd.f32 %v402, %v2395
    %2397 = vmatprep.mubr.bf16.mxu0 0
    %2398 = vmatmul.mubr.bf16.gmra.mrb[0].mxu0 %v64
    %v2399 = vpop.f32.mrb[0].mxu0
    %v2400 = vadd.f32 %v398, %v2399
    %v2401 = vpop.f32.mrb[0].mxu0
    %v2402 = vadd.f32 %v402, %v2401
    %v2403 = vpop.f32.mrb[0].mxu0
    %v2404 = vadd.f32 %v398, %v2403
    %v2405 = vpop.f32.mrb[0].mxu0
    %v2406 = vadd.f32 %v402, %v2405
    %2407 = vmatprep.mubr.bf16.mxu0 0
    %2408 = vmatmul.mubr.bf16.gmra.mrb[0].mxu0 %v65
    %v2409 = vpop.f32.mrb[0].mxu0
    %v2410 = vadd.f32 %v398, %v2409
    %v2411 = vpop.f32.mrb[0].mxu0
    %v2412 = vadd.f32 %v402, %v2411
    %v2413 = vpop.f32.mrb[0].mxu0
    %v2414 = vadd.f32 %v398, %v2413
    %v2415 = vpop.f32.mrb[0].mxu0
    %v2416 = vadd.f32 %v402, %v2415
    %2417 = vmatprep.mubr.bf16.mxu0 0
    %2418 = vmatmul.mubr.bf16.gmra.mrb[0].mxu0 %v66
    %v2419 = vpop.f32.mrb[0].mxu0
    %v2420 = vadd.f32 %v398, %v2419
    %v2421 = vpop.f32.mrb[0].mxu0
    %v2422 = vadd.f32 %v402, %v2421
    %v2423 = vpop.f32.mrb[0].mxu0
    %v2424 = vadd.f32 %v398, %v2423
    %v2425 = vpop.f32.mrb[0].mxu0
    %v2426 = vadd.f32 %v402, %v2425
    %2427 = vdwg.mxu0
    %2428 = vmatprep.subr.bf16.mxu0 %v1278
    %2429 = vmatpush1.bf16.msra.mxu0 %v1277
    %2430 = vmatprep.subr.bf16.mxu0 %v1310
    %2431 = vmatpush1.bf16.msra.mxu0 %v1309
    %2432 = vmatprep.subr.bf16.mxu0 %v1342
    %2433 = vmatpush1.bf16.msra.mxu0 %v1341
    %2434 = vmatprep.subr.bf16.mxu0 %v1374
    %2435 = vmatpush1.bf16.msra.mxu0 %v1373
    %2436 = vmatprep.subr.bf16.mxu0 %v1406
    %2437 = vmatpush1.bf16.msra.mxu0 %v1405
    %2438 = vmatprep.subr.bf16.mxu0 %v1438
    %2439 = vmatpush1.bf16.msra.mxu0 %v1437
    %2440 = vmatprep.subr.bf16.mxu0 %v1470
    %2441 = vmatpush1.bf16.msra.mxu0 %v1469
    %2442 = vmatprep.subr.bf16.mxu0 %v1502
    %2443 = vmatpush1.bf16.msra.mxu0 %v1501
    %2444 = vmatprep.subr.bf16.mxu0 0
    %2445 = vmatpush1.bf16.msra.mxu0 0
    %2446 = vmatprep.subr.bf16.mxu0 0
    %2447 = vmatpush1.bf16.msra.mxu0 0
    %2448 = vmatprep.subr.bf16.mxu0 0
    %2449 = vmatpush1.bf16.msra.mxu0 0
    %2450 = vmatprep.subr.bf16.mxu0 0
    %2451 = vmatpush1.bf16.msra.mxu0 0
    %2452 = vmatprep.subr.bf16.mxu0 0
    %2453 = vmatpush1.bf16.msra.mxu0 0
    %2454 = vmatprep.subr.bf16.mxu0 0
    %2455 = vmatpush1.bf16.msra.mxu0 0
    %2456 = vmatprep.subr.bf16.mxu0 0
    %2457 = vmatpush1.bf16.msra.mxu0 0
    %2458 = vmatprep.subr.bf16.mxu0 0
    %2459 = vmatpush1.bf16.msra.mxu0 0
    %2460 = vmatprep.mubr.bf16.mxu0 0
    %2461 = vmatmul.mubr.bf16.gmra.mrb[0].mxu0 %v63
    %v2462 = vpop.f32.mrb[0].mxu0
    %v2463 = vadd.f32 %v406, %v2462
    %v2464 = vpop.f32.mrb[0].mxu0
    %v2465 = vadd.f32 %v410, %v2464
    %v2466 = vpop.f32.mrb[0].mxu0
    %v2467 = vadd.f32 %v406, %v2466
    %v2468 = vpop.f32.mrb[0].mxu0
    %v2469 = vadd.f32 %v410, %v2468
    %2470 = vmatprep.mubr.bf16.mxu0 0
    %2471 = vmatmul.mubr.bf16.gmra.mrb[0].mxu0 %v64
    %v2472 = vpop.f32.mrb[0].mxu0
    %v2473 = vadd.f32 %v406, %v2472
    %v2474 = vpop.f32.mrb[0].mxu0
    %v2475 = vadd.f32 %v410, %v2474
    %v2476 = vpop.f32.mrb[0].mxu0
    %v2477 = vadd.f32 %v406, %v2476
    %v2478 = vpop.f32.mrb[0].mxu0
    %v2479 = vadd.f32 %v410, %v2478
    %2480 = vmatprep.mubr.bf16.mxu0 0
    %2481 = vmatmul.mubr.bf16.gmra.mrb[0].mxu0 %v65
    %v2482 = vpop.f32.mrb[0].mxu0
    %v2483 = vadd.f32 %v406, %v2482
    %v2484 = vpop.f32.mrb[0].mxu0
    %v2485 = vadd.f32 %v410, %v2484
    %v2486 = vpop.f32.mrb[0].mxu0
    %v2487 = vadd.f32 %v406, %v2486
    %v2488 = vpop.f32.mrb[0].mxu0
    %v2489 = vadd.f32 %v410, %v2488
    %2490 = vmatprep.mubr.bf16.mxu0 0
    %2491 = vmatmul.mubr.bf16.gmra.mrb[0].mxu0 %v66
    %v2492 = vpop.f32.mrb[0].mxu0
    %v2493 = vadd.f32 %v406, %v2492
    %v2494 = vpop.f32.mrb[0].mxu0
    %v2495 = vadd.f32 %v410, %v2494
    %v2496 = vpop.f32.mrb[0].mxu0
    %v2497 = vadd.f32 %v406, %v2496
    %v2498 = vpop.f32.mrb[0].mxu0
    %v2499 = vadd.f32 %v410, %v2498
    %2500 = vdwg.mxu0
    %2501 = vmatprep.subr.bf16.mxu0 %v1280
    %2502 = vmatpush1.bf16.msra.mxu0 %v1279
    %2503 = vmatprep.subr.bf16.mxu0 %v1312
    %2504 = vmatpush1.bf16.msra.mxu0 %v1311
    %2505 = vmatprep.subr.bf16.mxu0 %v1344
    %2506 = vmatpush1.bf16.msra.mxu0 %v1343
    %2507 = vmatprep.subr.bf16.mxu0 %v1376
    %2508 = vmatpush1.bf16.msra.mxu0 %v1375
    %2509 = vmatprep.subr.bf16.mxu0 %v1408
    %2510 = vmatpush1.bf16.msra.mxu0 %v1407
    %2511 = vmatprep.subr.bf16.mxu0 %v1440
    %2512 = vmatpush1.bf16.msra.mxu0 %v1439
    %2513 = vmatprep.subr.bf16.mxu0 %v1472
    %2514 = vmatpush1.bf16.msra.mxu0 %v1471
    %2515 = vmatprep.subr.bf16.mxu0 %v1504
    %2516 = vmatpush1.bf16.msra.mxu0 %v1503
    %2517 = vmatprep.subr.bf16.mxu0 0
    %2518 = vmatpush1.bf16.msra.mxu0 0
    %2519 = vmatprep.subr.bf16.mxu0 0
    %2520 = vmatpush1.bf16.msra.mxu0 0
    %2521 = vmatprep.subr.bf16.mxu0 0
    %2522 = vmatpush1.bf16.msra.mxu0 0
    %2523 = vmatprep.subr.bf16.mxu0 0
    %2524 = vmatpush1.bf16.msra.mxu0 0
    %2525 = vmatprep.subr.bf16.mxu0 0
    %2526 = vmatpush1.bf16.msra.mxu0 0
    %2527 = vmatprep.subr.bf16.mxu0 0
    %2528 = vmatpush1.bf16.msra.mxu0 0
    %2529 = vmatprep.subr.bf16.mxu0 0
    %2530 = vmatpush1.bf16.msra.mxu0 0
    %2531 = vmatprep.subr.bf16.mxu0 0
    %2532 = vmatpush1.bf16.msra.mxu0 0
    %2533 = vmatprep.mubr.bf16.mxu0 0
    %2534 = vmatmul.mubr.bf16.gmra.mrb[0].mxu0 %v63
    %v2535 = vpop.f32.mrb[0].mxu0
    %v2536 = vadd.f32 %v414, %v2535
    %v2537 = vpop.f32.mrb[0].mxu0
    %v2538 = vadd.f32 %v418, %v2537
    %v2539 = vpop.f32.mrb[0].mxu0
    %v2540 = vadd.f32 %v414, %v2539
    %v2541 = vpop.f32.mrb[0].mxu0
    %v2542 = vadd.f32 %v418, %v2541
    %2543 = vmatprep.mubr.bf16.mxu0 0
    %2544 = vmatmul.mubr.bf16.gmra.mrb[0].mxu0 %v64
    %v2545 = vpop.f32.mrb[0].mxu0
    %v2546 = vadd.f32 %v414, %v2545
    %v2547 = vpop.f32.mrb[0].mxu0
    %v2548 = vadd.f32 %v418, %v2547
    %v2549 = vpop.f32.mrb[0].mxu0
    %v2550 = vadd.f32 %v414, %v2549
    %v2551 = vpop.f32.mrb[0].mxu0
    %v2552 = vadd.f32 %v418, %v2551
    %2553 = vmatprep.mubr.bf16.mxu0 0
    %2554 = vmatmul.mubr.bf16.gmra.mrb[0].mxu0 %v65
    %v2555 = vpop.f32.mrb[0].mxu0
    %v2556 = vadd.f32 %v414, %v2555
    %v2557 = vpop.f32.mrb[0].mxu0
    %v2558 = vadd.f32 %v418, %v2557
    %v2559 = vpop.f32.mrb[0].mxu0
    %v2560 = vadd.f32 %v414, %v2559
    %v2561 = vpop.f32.mrb[0].mxu0
    %v2562 = vadd.f32 %v418, %v2561
    %2563 = vmatprep.mubr.bf16.mxu0 0
    %2564 = vmatmul.mubr.bf16.gmra.mrb[0].mxu0 %v66
    %v2565 = vpop.f32.mrb[0].mxu0
    %v2566 = vadd.f32 %v414, %v2565
    %v2567 = vpop.f32.mrb[0].mxu0
    %v2568 = vadd.f32 %v418, %v2567
    %v2569 = vpop.f32.mrb[0].mxu0
    %v2570 = vadd.f32 %v414, %v2569
    %v2571 = vpop.f32.mrb[0].mxu0
    %v2572 = vadd.f32 %v418, %v2571
    %2573 = vdwg.mxu0
    %2574 = vmatprep.subr.bf16.mxu0 %v1282
    %2575 = vmatpush1.bf16.msra.mxu0 %v1281
    %2576 = vmatprep.subr.bf16.mxu0 %v1314
    %2577 = vmatpush1.bf16.msra.mxu0 %v1313
    %2578 = vmatprep.subr.bf16.mxu0 %v1346
    %2579 = vmatpush1.bf16.msra.mxu0 %v1345
    %2580 = vmatprep.subr.bf16.mxu0 %v1378
    %2581 = vmatpush1.bf16.msra.mxu0 %v1377
    %2582 = vmatprep.subr.bf16.mxu0 %v1410
    %2583 = vmatpush1.bf16.msra.mxu0 %v1409
    %2584 = vmatprep.subr.bf16.mxu0 %v1442
    %2585 = vmatpush1.bf16.msra.mxu0 %v1441
    %2586 = vmatprep.subr.bf16.mxu0 %v1474
    %2587 = vmatpush1.bf16.msra.mxu0 %v1473
    %2588 = vmatprep.subr.bf16.mxu0 %v1506
    %2589 = vmatpush1.bf16.msra.mxu0 %v1505
    %2590 = vmatprep.subr.bf16.mxu0 0
    %2591 = vmatpush1.bf16.msra.mxu0 0
    %2592 = vmatprep.subr.bf16.mxu0 0
    %2593 = vmatpush1.bf16.msra.mxu0 0
    %2594 = vmatprep.subr.bf16.mxu0 0
    %2595 = vmatpush1.bf16.msra.mxu0 0
    %2596 = vmatprep.subr.bf16.mxu0 0
    %2597 = vmatpush1.bf16.msra.mxu0 0
    %2598 = vmatprep.subr.bf16.mxu0 0
    %2599 = vmatpush1.bf16.msra.mxu0 0
    %2600 = vmatprep.subr.bf16.mxu0 0
    %2601 = vmatpush1.bf16.msra.mxu0 0
    %2602 = vmatprep.subr.bf16.mxu0 0
    %2603 = vmatpush1.bf16.msra.mxu0 0
    %2604 = vmatprep.subr.bf16.mxu0 0
    %2605 = vmatpush1.bf16.msra.mxu0 0
    %2606 = vmatprep.mubr.bf16.mxu0 0
    %2607 = vmatmul.mubr.bf16.gmra.mrb[0].mxu0 %v63
    %v2608 = vpop.f32.mrb[0].mxu0
    %v2609 = vadd.f32 %v422, %v2608
    %v2610 = vpop.f32.mrb[0].mxu0
    %v2611 = vadd.f32 %v426, %v2610
    %v2612 = vpop.f32.mrb[0].mxu0
    %v2613 = vadd.f32 %v422, %v2612
    %v2614 = vpop.f32.mrb[0].mxu0
    %v2615 = vadd.f32 %v426, %v2614
    %2616 = vmatprep.mubr.bf16.mxu0 0
    %2617 = vmatmul.mubr.bf16.gmra.mrb[0].mxu0 %v64
    %v2618 = vpop.f32.mrb[0].mxu0
    %v2619 = vadd.f32 %v422, %v2618
    %v2620 = vpop.f32.mrb[0].mxu0
    %v2621 = vadd.f32 %v426, %v2620
    %v2622 = vpop.f32.mrb[0].mxu0
    %v2623 = vadd.f32 %v422, %v2622
    %v2624 = vpop.f32.mrb[0].mxu0
    %v2625 = vadd.f32 %v426, %v2624
    %2626 = vmatprep.mubr.bf16.mxu0 0
    %2627 = vmatmul.mubr.bf16.gmra.mrb[0].mxu0 %v65
    %v2628 = vpop.f32.mrb[0].mxu0
    %v2629 = vadd.f32 %v422, %v2628
    %v2630 = vpop.f32.mrb[0].mxu0
    %v2631 = vadd.f32 %v426, %v2630
    %v2632 = vpop.f32.mrb[0].mxu0
    %v2633 = vadd.f32 %v422, %v2632
    %v2634 = vpop.f32.mrb[0].mxu0
    %v2635 = vadd.f32 %v426, %v2634
    %2636 = vmatprep.mubr.bf16.mxu0 0
    %2637 = vmatmul.mubr.bf16.gmra.mrb[0].mxu0 %v66
    %v2638 = vpop.f32.mrb[0].mxu0
    %v2639 = vadd.f32 %v422, %v2638
    %v2640 = vpop.f32.mrb[0].mxu0
    %v2641 = vadd.f32 %v426, %v2640
    %v2642 = vpop.f32.mrb[0].mxu0
    %v2643 = vadd.f32 %v422, %v2642
    %v2644 = vpop.f32.mrb[0].mxu0
    %v2645 = vadd.f32 %v426, %v2644
    %2646 = vdwg.mxu0
    %2647 = vmatprep.subr.bf16.mxu0 %v1284
    %2648 = vmatpush1.bf16.msra.mxu0 %v1283
    %2649 = vmatprep.subr.bf16.mxu0 %v1316
    %2650 = vmatpush1.bf16.msra.mxu0 %v1315
    %2651 = vmatprep.subr.bf16.mxu0 %v1348
    %2652 = vmatpush1.bf16.msra.mxu0 %v1347
    %2653 = vmatprep.subr.bf16.mxu0 %v1380
    %2654 = vmatpush1.bf16.msra.mxu0 %v1379
    %2655 = vmatprep.subr.bf16.mxu0 %v1412
    %2656 = vmatpush1.bf16.msra.mxu0 %v1411
    %2657 = vmatprep.subr.bf16.mxu0 %v1444
    %2658 = vmatpush1.bf16.msra.mxu0 %v1443
    %2659 = vmatprep.subr.bf16.mxu0 %v1476
    %2660 = vmatpush1.bf16.msra.mxu0 %v1475
    %2661 = vmatprep.subr.bf16.mxu0 %v1508
    %2662 = vmatpush1.bf16.msra.mxu0 %v1507
    %2663 = vmatprep.subr.bf16.mxu0 0
    %2664 = vmatpush1.bf16.msra.mxu0 0
    %2665 = vmatprep.subr.bf16.mxu0 0
    %2666 = vmatpush1.bf16.msra.mxu0 0
    %2667 = vmatprep.subr.bf16.mxu0 0
    %2668 = vmatpush1.bf16.msra.mxu0 0
    %2669 = vmatprep.subr.bf16.mxu0 0
    %2670 = vmatpush1.bf16.msra.mxu0 0
    %2671 = vmatprep.subr.bf16.mxu0 0
    %2672 = vmatpush1.bf16.msra.mxu0 0
    %2673 = vmatprep.subr.bf16.mxu0 0
    %2674 = vmatpush1.bf16.msra.mxu0 0
    %2675 = vmatprep.subr.bf16.mxu0 0
    %2676 = vmatpush1.bf16.msra.mxu0 0
    %2677 = vmatprep.subr.bf16.mxu0 0
    %2678 = vmatpush1.bf16.msra.mxu0 0
    %2679 = vmatprep.mubr.bf16.mxu0 0
    %2680 = vmatmul.mubr.bf16.gmra.mrb[0].mxu0 %v63
    %v2681 = vpop.f32.mrb[0].mxu0
    %v2682 = vadd.f32 %v430, %v2681
    %v2683 = vpop.f32.mrb[0].mxu0
    %v2684 = vadd.f32 %v434, %v2683
    %v2685 = vpop.f32.mrb[0].mxu0
    %v2686 = vadd.f32 %v430, %v2685
    %v2687 = vpop.f32.mrb[0].mxu0
    %v2688 = vadd.f32 %v434, %v2687
    %2689 = vmatprep.mubr.bf16.mxu0 0
    %2690 = vmatmul.mubr.bf16.gmra.mrb[0].mxu0 %v64
    %v2691 = vpop.f32.mrb[0].mxu0
    %v2692 = vadd.f32 %v430, %v2691
    %v2693 = vpop.f32.mrb[0].mxu0
    %v2694 = vadd.f32 %v434, %v2693
    %v2695 = vpop.f32.mrb[0].mxu0
    %v2696 = vadd.f32 %v430, %v2695
    %v2697 = vpop.f32.mrb[0].mxu0
    %v2698 = vadd.f32 %v434, %v2697
    %2699 = vmatprep.mubr.bf16.mxu0 0
    %2700 = vmatmul.mubr.bf16.gmra.mrb[0].mxu0 %v65
    %v2701 = vpop.f32.mrb[0].mxu0
    %v2702 = vadd.f32 %v430, %v2701
    %v2703 = vpop.f32.mrb[0].mxu0
    %v2704 = vadd.f32 %v434, %v2703
    %v2705 = vpop.f32.mrb[0].mxu0
    %v2706 = vadd.f32 %v430, %v2705
    %v2707 = vpop.f32.mrb[0].mxu0
    %v2708 = vadd.f32 %v434, %v2707
    %2709 = vmatprep.mubr.bf16.mxu0 0
    %2710 = vmatmul.mubr.bf16.gmra.mrb[0].mxu0 %v66
    %v2711 = vpop.f32.mrb[0].mxu0
    %v2712 = vadd.f32 %v430, %v2711
    %v2713 = vpop.f32.mrb[0].mxu0
    %v2714 = vadd.f32 %v434, %v2713
    %v2715 = vpop.f32.mrb[0].mxu0
    %v2716 = vadd.f32 %v430, %v2715
    %v2717 = vpop.f32.mrb[0].mxu0
    %v2718 = vadd.f32 %v434, %v2717
    %2719 = vdwg.mxu0
    %2720 = vmatprep.subr.bf16.mxu0 %v1286
    %2721 = vmatpush1.bf16.msra.mxu0 %v1285
    %2722 = vmatprep.subr.bf16.mxu0 %v1318
    %2723 = vmatpush1.bf16.msra.mxu0 %v1317
    %2724 = vmatprep.subr.bf16.mxu0 %v1350
    %2725 = vmatpush1.bf16.msra.mxu0 %v1349
    %2726 = vmatprep.subr.bf16.mxu0 %v1382
    %2727 = vmatpush1.bf16.msra.mxu0 %v1381
    %2728 = vmatprep.subr.bf16.mxu0 %v1414
    %2729 = vmatpush1.bf16.msra.mxu0 %v1413
    %2730 = vmatprep.subr.bf16.mxu0 %v1446
    %2731 = vmatpush1.bf16.msra.mxu0 %v1445
    %2732 = vmatprep.subr.bf16.mxu0 %v1478
    %2733 = vmatpush1.bf16.msra.mxu0 %v1477
    %2734 = vmatprep.subr.bf16.mxu0 %v1510
    %2735 = vmatpush1.bf16.msra.mxu0 %v1509
    %2736 = vmatprep.subr.bf16.mxu0 0
    %2737 = vmatpush1.bf16.msra.mxu0 0
    %2738 = vmatprep.subr.bf16.mxu0 0
    %2739 = vmatpush1.bf16.msra.mxu0 0
    %2740 = vmatprep.subr.bf16.mxu0 0
    %2741 = vmatpush1.bf16.msra.mxu0 0
    %2742 = vmatprep.subr.bf16.mxu0 0
    %2743 = vmatpush1.bf16.msra.mxu0 0
    %2744 = vmatprep.subr.bf16.mxu0 0
    %2745 = vmatpush1.bf16.msra.mxu0 0
    %2746 = vmatprep.subr.bf16.mxu0 0
    %2747 = vmatpush1.bf16.msra.mxu0 0
    %2748 = vmatprep.subr.bf16.mxu0 0
    %2749 = vmatpush1.bf16.msra.mxu0 0
    %2750 = vmatprep.subr.bf16.mxu0 0
    %2751 = vmatpush1.bf16.msra.mxu0 0
    %2752 = vmatprep.mubr.bf16.mxu0 0
    %2753 = vmatmul.mubr.bf16.gmra.mrb[0].mxu0 %v63
    %v2754 = vpop.f32.mrb[0].mxu0
    %v2755 = vadd.f32 %v438, %v2754
    %v2756 = vpop.f32.mrb[0].mxu0
    %v2757 = vadd.f32 %v442, %v2756
    %v2758 = vpop.f32.mrb[0].mxu0
    %v2759 = vadd.f32 %v438, %v2758
    %v2760 = vpop.f32.mrb[0].mxu0
    %v2761 = vadd.f32 %v442, %v2760
    %2762 = vmatprep.mubr.bf16.mxu0 0
    %2763 = vmatmul.mubr.bf16.gmra.mrb[0].mxu0 %v64
    %v2764 = vpop.f32.mrb[0].mxu0
    %v2765 = vadd.f32 %v438, %v2764
    %v2766 = vpop.f32.mrb[0].mxu0
    %v2767 = vadd.f32 %v442, %v2766
    %v2768 = vpop.f32.mrb[0].mxu0
    %v2769 = vadd.f32 %v438, %v2768
    %v2770 = vpop.f32.mrb[0].mxu0
    %v2771 = vadd.f32 %v442, %v2770
    %2772 = vmatprep.mubr.bf16.mxu0 0
    %2773 = vmatmul.mubr.bf16.gmra.mrb[0].mxu0 %v65
    %v2774 = vpop.f32.mrb[0].mxu0
    %v2775 = vadd.f32 %v438, %v2774
    %v2776 = vpop.f32.mrb[0].mxu0
    %v2777 = vadd.f32 %v442, %v2776
    %v2778 = vpop.f32.mrb[0].mxu0
    %v2779 = vadd.f32 %v438, %v2778
    %v2780 = vpop.f32.mrb[0].mxu0
    %v2781 = vadd.f32 %v442, %v2780
    %2782 = vmatprep.mubr.bf16.mxu0 0
    %2783 = vmatmul.mubr.bf16.gmra.mrb[0].mxu0 %v66
    %v2784 = vpop.f32.mrb[0].mxu0
    %v2785 = vadd.f32 %v438, %v2784
    %v2786 = vpop.f32.mrb[0].mxu0
    %v2787 = vadd.f32 %v442, %v2786
    %v2788 = vpop.f32.mrb[0].mxu0
    %v2789 = vadd.f32 %v438, %v2788
    %v2790 = vpop.f32.mrb[0].mxu0
    %v2791 = vadd.f32 %v442, %v2790
    %2792 = vdwg.mxu0
    %2793 = vmatprep.subr.bf16.mxu0 %v1288
    %2794 = vmatpush1.bf16.msra.mxu0 %v1287
    %2795 = vmatprep.subr.bf16.mxu0 %v1320
    %2796 = vmatpush1.bf16.msra.mxu0 %v1319
    %2797 = vmatprep.subr.bf16.mxu0 %v1352
    %2798 = vmatpush1.bf16.msra.mxu0 %v1351
    %2799 = vmatprep.subr.bf16.mxu0 %v1384
    %2800 = vmatpush1.bf16.msra.mxu0 %v1383
    %2801 = vmatprep.subr.bf16.mxu0 %v1416
    %2802 = vmatpush1.bf16.msra.mxu0 %v1415
    %2803 = vmatprep.subr.bf16.mxu0 %v1448
    %2804 = vmatpush1.bf16.msra.mxu0 %v1447
    %2805 = vmatprep.subr.bf16.mxu0 %v1480
    %2806 = vmatpush1.bf16.msra.mxu0 %v1479
    %2807 = vmatprep.subr.bf16.mxu0 %v1512
    %2808 = vmatpush1.bf16.msra.mxu0 %v1511
    %2809 = vmatprep.subr.bf16.mxu0 0
    %2810 = vmatpush1.bf16.msra.mxu0 0
    %2811 = vmatprep.subr.bf16.mxu0 0
    %2812 = vmatpush1.bf16.msra.mxu0 0
    %2813 = vmatprep.subr.bf16.mxu0 0
    %2814 = vmatpush1.bf16.msra.mxu0 0
    %2815 = vmatprep.subr.bf16.mxu0 0
    %2816 = vmatpush1.bf16.msra.mxu0 0
    %2817 = vmatprep.subr.bf16.mxu0 0
    %2818 = vmatpush1.bf16.msra.mxu0 0
    %2819 = vmatprep.subr.bf16.mxu0 0
    %2820 = vmatpush1.bf16.msra.mxu0 0
    %2821 = vmatprep.subr.bf16.mxu0 0
    %2822 = vmatpush1.bf16.msra.mxu0 0
    %2823 = vmatprep.subr.bf16.mxu0 0
    %2824 = vmatpush1.bf16.msra.mxu0 0
    %2825 = vmatprep.mubr.bf16.mxu0 0
    %2826 = vmatmul.mubr.bf16.gmra.mrb[0].mxu0 %v63
    %v2827 = vpop.f32.mrb[0].mxu0
    %v2828 = vadd.f32 %v446, %v2827
    %v2829 = vpop.f32.mrb[0].mxu0
    %v2830 = vadd.f32 %v450, %v2829
    %v2831 = vpop.f32.mrb[0].mxu0
    %v2832 = vadd.f32 %v446, %v2831
    %v2833 = vpop.f32.mrb[0].mxu0
    %v2834 = vadd.f32 %v450, %v2833
    %2835 = vmatprep.mubr.bf16.mxu0 0
    %2836 = vmatmul.mubr.bf16.gmra.mrb[0].mxu0 %v64
    %v2837 = vpop.f32.mrb[0].mxu0
    %v2838 = vadd.f32 %v446, %v2837
    %v2839 = vpop.f32.mrb[0].mxu0
    %v2840 = vadd.f32 %v450, %v2839
    %v2841 = vpop.f32.mrb[0].mxu0
    %v2842 = vadd.f32 %v446, %v2841
    %v2843 = vpop.f32.mrb[0].mxu0
    %v2844 = vadd.f32 %v450, %v2843
    %2845 = vmatprep.mubr.bf16.mxu0 0
    %2846 = vmatmul.mubr.bf16.gmra.mrb[0].mxu0 %v65
    %v2847 = vpop.f32.mrb[0].mxu0
    %v2848 = vadd.f32 %v446, %v2847
    %v2849 = vpop.f32.mrb[0].mxu0
    %v2850 = vadd.f32 %v450, %v2849
    %v2851 = vpop.f32.mrb[0].mxu0
    %v2852 = vadd.f32 %v446, %v2851
    %v2853 = vpop.f32.mrb[0].mxu0
    %v2854 = vadd.f32 %v450, %v2853
    %2855 = vmatprep.mubr.bf16.mxu0 0
    %2856 = vmatmul.mubr.bf16.gmra.mrb[0].mxu0 %v66
    %v2857 = vpop.f32.mrb[0].mxu0
    %v2858 = vadd.f32 %v446, %v2857
    %v2859 = vpop.f32.mrb[0].mxu0
    %v2860 = vadd.f32 %v450, %v2859
    %v2861 = vpop.f32.mrb[0].mxu0
    %v2862 = vadd.f32 %v446, %v2861
    %v2863 = vpop.f32.mrb[0].mxu0
    %v2864 = vadd.f32 %v450, %v2863
    %2865 = vdwg.mxu0
    %2866 = vmatprep.subr.bf16.mxu0 %v1290
    %2867 = vmatpush1.bf16.msra.mxu0 %v1289
    %2868 = vmatprep.subr.bf16.mxu0 %v1322
    %2869 = vmatpush1.bf16.msra.mxu0 %v1321
    %2870 = vmatprep.subr.bf16.mxu0 %v1354
    %2871 = vmatpush1.bf16.msra.mxu0 %v1353
    %2872 = vmatprep.subr.bf16.mxu0 %v1386
    %2873 = vmatpush1.bf16.msra.mxu0 %v1385
    %2874 = vmatprep.subr.bf16.mxu0 %v1418
    %2875 = vmatpush1.bf16.msra.mxu0 %v1417
    %2876 = vmatprep.subr.bf16.mxu0 %v1450
    %2877 = vmatpush1.bf16.msra.mxu0 %v1449
    %2878 = vmatprep.subr.bf16.mxu0 %v1482
    %2879 = vmatpush1.bf16.msra.mxu0 %v1481
    %2880 = vmatprep.subr.bf16.mxu0 %v1514
    %2881 = vmatpush1.bf16.msra.mxu0 %v1513
    %2882 = vmatprep.subr.bf16.mxu0 0
    %2883 = vmatpush1.bf16.msra.mxu0 0
    %2884 = vmatprep.subr.bf16.mxu0 0
    %2885 = vmatpush1.bf16.msra.mxu0 0
    %2886 = vmatprep.subr.bf16.mxu0 0
    %2887 = vmatpush1.bf16.msra.mxu0 0
    %2888 = vmatprep.subr.bf16.mxu0 0
    %2889 = vmatpush1.bf16.msra.mxu0 0
    %2890 = vmatprep.subr.bf16.mxu0 0
    %2891 = vmatpush1.bf16.msra.mxu0 0
    %2892 = vmatprep.subr.bf16.mxu0 0
    %2893 = vmatpush1.bf16.msra.mxu0 0
    %2894 = vmatprep.subr.bf16.mxu0 0
    %2895 = vmatpush1.bf16.msra.mxu0 0
    %2896 = vmatprep.subr.bf16.mxu0 0
    %2897 = vmatpush1.bf16.msra.mxu0 0
    %2898 = vmatprep.mubr.bf16.mxu0 0
    %2899 = vmatmul.mubr.bf16.gmra.mrb[0].mxu0 %v63
    %v2900 = vpop.f32.mrb[0].mxu0
    %v2901 = vadd.f32 %v454, %v2900
    %v2902 = vpop.f32.mrb[0].mxu0
    %v2903 = vadd.f32 %v458, %v2902
    %v2904 = vpop.f32.mrb[0].mxu0
    %v2905 = vadd.f32 %v454, %v2904
    %v2906 = vpop.f32.mrb[0].mxu0
    %v2907 = vadd.f32 %v458, %v2906
    %2908 = vmatprep.mubr.bf16.mxu0 0
    %2909 = vmatmul.mubr.bf16.gmra.mrb[0].mxu0 %v64
    %v2910 = vpop.f32.mrb[0].mxu0
    %v2911 = vadd.f32 %v454, %v2910
    %v2912 = vpop.f32.mrb[0].mxu0
    %v2913 = vadd.f32 %v458, %v2912
    %v2914 = vpop.f32.mrb[0].mxu0
    %v2915 = vadd.f32 %v454, %v2914
    %v2916 = vpop.f32.mrb[0].mxu0
    %v2917 = vadd.f32 %v458, %v2916
    %2918 = vmatprep.mubr.bf16.mxu0 0
    %2919 = vmatmul.mubr.bf16.gmra.mrb[0].mxu0 %v65
    %v2920 = vpop.f32.mrb[0].mxu0
    %v2921 = vadd.f32 %v454, %v2920
    %v2922 = vpop.f32.mrb[0].mxu0
    %v2923 = vadd.f32 %v458, %v2922
    %v2924 = vpop.f32.mrb[0].mxu0
    %v2925 = vadd.f32 %v454, %v2924
    %v2926 = vpop.f32.mrb[0].mxu0
    %v2927 = vadd.f32 %v458, %v2926
    %2928 = vmatprep.mubr.bf16.mxu0 0
    %2929 = vmatmul.mubr.bf16.gmra.mrb[0].mxu0 %v66
    %v2930 = vpop.f32.mrb[0].mxu0
    %v2931 = vadd.f32 %v454, %v2930
    %v2932 = vpop.f32.mrb[0].mxu0
    %v2933 = vadd.f32 %v458, %v2932
    %v2934 = vpop.f32.mrb[0].mxu0
    %v2935 = vadd.f32 %v454, %v2934
    %v2936 = vpop.f32.mrb[0].mxu0
    %v2937 = vadd.f32 %v458, %v2936
    %2938 = vdwg.mxu0
    %2939 = vst [vmem:[#allocation8] sm:$0xff] %v1806
    %2940 = vst [vmem:[#allocation8 + $0x8] sm:$0xff] %v1808
    %2941 = vst [vmem:[#allocation8 + $0x10] sm:$0xff] %v1879
    %2942 = vst [vmem:[#allocation8 + $0x18] sm:$0xff] %v1881
    %2943 = vst [vmem:[#allocation8 + $0x20] sm:$0xff] %v1952
    %2944 = vst [vmem:[#allocation8 + $0x28] sm:$0xff] %v1954
    %2945 = vst [vmem:[#allocation8 + $0x30] sm:$0xff] %v2025
    %2946 = vst [vmem:[#allocation8 + $0x38] sm:$0xff] %v2027
    %2947 = vst [vmem:[#allocation8 + $0x40] sm:$0xff] %v2098
    %2948 = vst [vmem:[#allocation8 + $0x48] sm:$0xff] %v2100
    %2949 = vst [vmem:[#allocation8 + $0x50] sm:$0xff] %v2171
    %2950 = vst [vmem:[#allocation8 + $0x58] sm:$0xff] %v2173
    %2951 = vst [vmem:[#allocation8 + $0x60] sm:$0xff] %v2244
    %2952 = vst [vmem:[#allocation8 + $0x68] sm:$0xff] %v2246
    %2953 = vst [vmem:[#allocation8 + $0x70] sm:$0xff] %v2317
    %2954 = vst [vmem:[#allocation8 + $0x78] sm:$0xff] %v2319
    %2955 = vst [vmem:[#allocation8 + $0x80] sm:$0xff] %v2390
    %2956 = vst [vmem:[#allocation8 + $0x88] sm:$0xff] %v2392
    %2957 = vst [vmem:[#allocation8 + $0x90] sm:$0xff] %v2463
    %2958 = vst [vmem:[#allocation8 + $0x98] sm:$0xff] %v2465
    %2959 = vst [vmem:[#allocation8 + $0xa0] sm:$0xff] %v2536
    %2960 = vst [vmem:[#allocation8 + $0xa8] sm:$0xff] %v2538
    %2961 = vst [vmem:[#allocation8 + $0xb0] sm:$0xff] %v2609
    %2962 = vst [vmem:[#allocation8 + $0xb8] sm:$0xff] %v2611
    %2963 = vst [vmem:[#allocation8 + $0xc0] sm:$0xff] %v2682
    %2964 = vst [vmem:[#allocation8 + $0xc8] sm:$0xff] %v2684
    %2965 = vst [vmem:[#allocation8 + $0xd0] sm:$0xff] %v2755
    %2966 = vst [vmem:[#allocation8 + $0xd8] sm:$0xff] %v2757
    %2967 = vst [vmem:[#allocation8 + $0xe0] sm:$0xff] %v2828
    %2968 = vst [vmem:[#allocation8 + $0xe8] sm:$0xff] %v2830
    %2969 = vst [vmem:[#allocation8 + $0xf0] sm:$0xff] %v2901
    %2970 = vst [vmem:[#allocation8 + $0xf8] sm:$0xff] %v2903
    %2971 = vst [vmem:[#allocation8 + $0x100] sm:$0xff] %v1810
    %2972 = vst [vmem:[#allocation8 + $0x108] sm:$0xff] %v1812
    %2973 = vst [vmem:[#allocation8 + $0x110] sm:$0xff] %v1883
    %2974 = vst [vmem:[#allocation8 + $0x118] sm:$0xff] %v1885
    %2975 = vst [vmem:[#allocation8 + $0x120] sm:$0xff] %v1956
    %2976 = vst [vmem:[#allocation8 + $0x128] sm:$0xff] %v1958
    %2977 = vst [vmem:[#allocation8 + $0x130] sm:$0xff] %v2029
    %2978 = vst [vmem:[#allocation8 + $0x138] sm:$0xff] %v2031
    %2979 = vst [vmem:[#allocation8 + $0x140] sm:$0xff] %v2102
    %2980 = vst [vmem:[#allocation8 + $0x148] sm:$0xff] %v2104
    %2981 = vst [vmem:[#allocation8 + $0x150] sm:$0xff] %v2175
    %2982 = vst [vmem:[#allocation8 + $0x158] sm:$0xff] %v2177
    %2983 = vst [vmem:[#allocation8 + $0x160] sm:$0xff] %v2248
    %2984 = vst [vmem:[#allocation8 + $0x168] sm:$0xff] %v2250
    %2985 = vst [vmem:[#allocation8 + $0x170] sm:$0xff] %v2321
    %2986 = vst [vmem:[#allocation8 + $0x178] sm:$0xff] %v2323
    %2987 = vst [vmem:[#allocation8 + $0x180] sm:$0xff] %v2394
    %2988 = vst [vmem:[#allocation8 + $0x188] sm:$0xff] %v2396
    %2989 = vst [vmem:[#allocation8 + $0x190] sm:$0xff] %v2467
    %2990 = vst [vmem:[#allocation8 + $0x198] sm:$0xff] %v2469
    %2991 = vst [vmem:[#allocation8 + $0x1a0] sm:$0xff] %v2540
    %2992 = vst [vmem:[#allocation8 + $0x1a8] sm:$0xff] %v2542
    %2993 = vst [vmem:[#allocation8 + $0x1b0] sm:$0xff] %v2613
    %2994 = vst [vmem:[#allocation8 + $0x1b8] sm:$0xff] %v2615
    %2995 = vst [vmem:[#allocation8 + $0x1c0] sm:$0xff] %v2686
    %2996 = vst [vmem:[#allocation8 + $0x1c8] sm:$0xff] %v2688
    %2997 = vst [vmem:[#allocation8 + $0x1d0] sm:$0xff] %v2759
    %2998 = vst [vmem:[#allocation8 + $0x1d8] sm:$0xff] %v2761
    %2999 = vst [vmem:[#allocation8 + $0x1e0] sm:$0xff] %v2832
    %3000 = vst [vmem:[#allocation8 + $0x1e8] sm:$0xff] %v2834
    %3001 = vst [vmem:[#allocation8 + $0x1f0] sm:$0xff] %v2905
    %3002 = vst [vmem:[#allocation8 + $0x1f8] sm:$0xff] %v2907
    %3003 = vst [vmem:[#allocation8 + $0x200] sm:$0xff] %v1816
    %3004 = vst [vmem:[#allocation8 + $0x208] sm:$0xff] %v1818
    %3005 = vst [vmem:[#allocation8 + $0x210] sm:$0xff] %v1889
    %3006 = vst [vmem:[#allocation8 + $0x218] sm:$0xff] %v1891
    %3007 = vst [vmem:[#allocation8 + $0x220] sm:$0xff] %v1962
    %3008 = vst [vmem:[#allocation8 + $0x228] sm:$0xff] %v1964
    %3009 = vst [vmem:[#allocation8 + $0x230] sm:$0xff] %v2035
    %3010 = vst [vmem:[#allocation8 + $0x238] sm:$0xff] %v2037
    %3011 = vst [vmem:[#allocation8 + $0x240] sm:$0xff] %v2108
    %3012 = vst [vmem:[#allocation8 + $0x248] sm:$0xff] %v2110
    %3013 = vst [vmem:[#allocation8 + $0x250] sm:$0xff] %v2181
    %3014 = vst [vmem:[#allocation8 + $0x258] sm:$0xff] %v2183
    %3015 = vst [vmem:[#allocation8 + $0x260] sm:$0xff] %v2254
    %3016 = vst [vmem:[#allocation8 + $0x268] sm:$0xff] %v2256
    %3017 = vst [vmem:[#allocation8 + $0x270] sm:$0xff] %v2327
    %3018 = vst [vmem:[#allocation8 + $0x278] sm:$0xff] %v2329
    %3019 = vst [vmem:[#allocation8 + $0x280] sm:$0xff] %v2400
    %3020 = vst [vmem:[#allocation8 + $0x288] sm:$0xff] %v2402
    %3021 = vst [vmem:[#allocation8 + $0x290] sm:$0xff] %v2473
    %3022 = vst [vmem:[#allocation8 + $0x298] sm:$0xff] %v2475
    %3023 = vst [vmem:[#allocation8 + $0x2a0] sm:$0xff] %v2546
    %3024 = vst [vmem:[#allocation8 + $0x2a8] sm:$0xff] %v2548
    %3025 = vst [vmem:[#allocation8 + $0x2b0] sm:$0xff] %v2619
    %3026 = vst [vmem:[#allocation8 + $0x2b8] sm:$0xff] %v2621
    %3027 = vst [vmem:[#allocation8 + $0x2c0] sm:$0xff] %v2692
    %3028 = vst [vmem:[#allocation8 + $0x2c8] sm:$0xff] %v2694
    %3029 = vst [vmem:[#allocation8 + $0x2d0] sm:$0xff] %v2765
    %3030 = vst [vmem:[#allocation8 + $0x2d8] sm:$0xff] %v2767
    %3031 = vst [vmem:[#allocation8 + $0x2e0] sm:$0xff] %v2838
    %3032 = vst [vmem:[#allocation8 + $0x2e8] sm:$0xff] %v2840
    %3033 = vst [vmem:[#allocation8 + $0x2f0] sm:$0xff] %v2911
    %3034 = vst [vmem:[#allocation8 + $0x2f8] sm:$0xff] %v2913
    %3035 = vst [vmem:[#allocation8 + $0x300] sm:$0xff] %v1820
    %3036 = vst [vmem:[#allocation8 + $0x308] sm:$0xff] %v1822
    %3037 = vst [vmem:[#allocation8 + $0x310] sm:$0xff] %v1893
    %3038 = vst [vmem:[#allocation8 + $0x318] sm:$0xff] %v1895
    %3039 = vst [vmem:[#allocation8 + $0x320] sm:$0xff] %v1966
    %3040 = vst [vmem:[#allocation8 + $0x328] sm:$0xff] %v1968
    %3041 = vst [vmem:[#allocation8 + $0x330] sm:$0xff] %v2039
    %3042 = vst [vmem:[#allocation8 + $0x338] sm:$0xff] %v2041
    %3043 = vst [vmem:[#allocation8 + $0x340] sm:$0xff] %v2112
    %3044 = vst [vmem:[#allocation8 + $0x348] sm:$0xff] %v2114
    %3045 = vst [vmem:[#allocation8 + $0x350] sm:$0xff] %v2185
    %3046 = vst [vmem:[#allocation8 + $0x358] sm:$0xff] %v2187
    %3047 = vst [vmem:[#allocation8 + $0x360] sm:$0xff] %v2258
    %3048 = vst [vmem:[#allocation8 + $0x368] sm:$0xff] %v2260
    %3049 = vst [vmem:[#allocation8 + $0x370] sm:$0xff] %v2331
    %3050 = vst [vmem:[#allocation8 + $0x378] sm:$0xff] %v2333
    %3051 = vst [vmem:[#allocation8 + $0x380] sm:$0xff] %v2404
    %3052 = vst [vmem:[#allocation8 + $0x388] sm:$0xff] %v2406
    %3053 = vst [vmem:[#allocation8 + $0x390] sm:$0xff] %v2477
    %3054 = vst [vmem:[#allocation8 + $0x398] sm:$0xff] %v2479
    %3055 = vst [vmem:[#allocation8 + $0x3a0] sm:$0xff] %v2550
    %3056 = vst [vmem:[#allocation8 + $0x3a8] sm:$0xff] %v2552
    %3057 = vst [vmem:[#allocation8 + $0x3b0] sm:$0xff] %v2623
    %3058 = vst [vmem:[#allocation8 + $0x3b8] sm:$0xff] %v2625
    %3059 = vst [vmem:[#allocation8 + $0x3c0] sm:$0xff] %v2696
    %3060 = vst [vmem:[#allocation8 + $0x3c8] sm:$0xff] %v2698
    %3061 = vst [vmem:[#allocation8 + $0x3d0] sm:$0xff] %v2769
    %3062 = vst [vmem:[#allocation8 + $0x3d8] sm:$0xff] %v2771
    %3063 = vst [vmem:[#allocation8 + $0x3e0] sm:$0xff] %v2842
    %3064 = vst [vmem:[#allocation8 + $0x3e8] sm:$0xff] %v2844
    %3065 = vst [vmem:[#allocation8 + $0x3f0] sm:$0xff] %v2915
    %3066 = vst [vmem:[#allocation8 + $0x3f8] sm:$0xff] %v2917
    %3067 = vst [vmem:[#allocation8 + $0x400] sm:$0xff] %v1826
    %3068 = vst [vmem:[#allocation8 + $0x408] sm:$0xff] %v1828
    %3069 = vst [vmem:[#allocation8 + $0x410] sm:$0xff] %v1899
    %3070 = vst [vmem:[#allocation8 + $0x418] sm:$0xff] %v1901
    %3071 = vst [vmem:[#allocation8 + $0x420] sm:$0xff] %v1972
    %3072 = vst [vmem:[#allocation8 + $0x428] sm:$0xff] %v1974
    %3073 = vst [vmem:[#allocation8 + $0x430] sm:$0xff] %v2045
    %3074 = vst [vmem:[#allocation8 + $0x438] sm:$0xff] %v2047
    %3075 = vst [vmem:[#allocation8 + $0x440] sm:$0xff] %v2118
    %3076 = vst [vmem:[#allocation8 + $0x448] sm:$0xff] %v2120
    %3077 = vst [vmem:[#allocation8 + $0x450] sm:$0xff] %v2191
    %3078 = vst [vmem:[#allocation8 + $0x458] sm:$0xff] %v2193
    %3079 = vst [vmem:[#allocation8 + $0x460] sm:$0xff] %v2264
    %3080 = vst [vmem:[#allocation8 + $0x468] sm:$0xff] %v2266
    %3081 = vst [vmem:[#allocation8 + $0x470] sm:$0xff] %v2337
    %3082 = vst [vmem:[#allocation8 + $0x478] sm:$0xff] %v2339
    %3083 = vst [vmem:[#allocation8 + $0x480] sm:$0xff] %v2410
    %3084 = vst [vmem:[#allocation8 + $0x488] sm:$0xff] %v2412
    %3085 = vst [vmem:[#allocation8 + $0x490] sm:$0xff] %v2483
    %3086 = vst [vmem:[#allocation8 + $0x498] sm:$0xff] %v2485
    %3087 = vst [vmem:[#allocation8 + $0x4a0] sm:$0xff] %v2556
    %3088 = vst [vmem:[#allocation8 + $0x4a8] sm:$0xff] %v2558
    %3089 = vst [vmem:[#allocation8 + $0x4b0] sm:$0xff] %v2629
    %3090 = vst [vmem:[#allocation8 + $0x4b8] sm:$0xff] %v2631
    %3091 = vst [vmem:[#allocation8 + $0x4c0] sm:$0xff] %v2702
    %3092 = vst [vmem:[#allocation8 + $0x4c8] sm:$0xff] %v2704
    %3093 = vst [vmem:[#allocation8 + $0x4d0] sm:$0xff] %v2775
    %3094 = vst [vmem:[#allocation8 + $0x4d8] sm:$0xff] %v2777
    %3095 = vst [vmem:[#allocation8 + $0x4e0] sm:$0xff] %v2848
    %3096 = vst [vmem:[#allocation8 + $0x4e8] sm:$0xff] %v2850
    %3097 = vst [vmem:[#allocation8 + $0x4f0] sm:$0xff] %v2921
    %3098 = vst [vmem:[#allocation8 + $0x4f8] sm:$0xff] %v2923
    %3099 = vst [vmem:[#allocation8 + $0x500] sm:$0xff] %v1830
    %3100 = vst [vmem:[#allocation8 + $0x508] sm:$0xff] %v1832
    %3101 = vst [vmem:[#allocation8 + $0x510] sm:$0xff] %v1903
    %3102 = vst [vmem:[#allocation8 + $0x518] sm:$0xff] %v1905
    %3103 = vst [vmem:[#allocation8 + $0x520] sm:$0xff] %v1976
    %3104 = vst [vmem:[#allocation8 + $0x528] sm:$0xff] %v1978
    %3105 = vst [vmem:[#allocation8 + $0x530] sm:$0xff] %v2049
    %3106 = vst [vmem:[#allocation8 + $0x538] sm:$0xff] %v2051
    %3107 = vst [vmem:[#allocation8 + $0x540] sm:$0xff] %v2122
    %3108 = vst [vmem:[#allocation8 + $0x548] sm:$0xff] %v2124
    %3109 = vst [vmem:[#allocation8 + $0x550] sm:$0xff] %v2195
    %3110 = vst [vmem:[#allocation8 + $0x558] sm:$0xff] %v2197
    %3111 = vst [vmem:[#allocation8 + $0x560] sm:$0xff] %v2268
    %3112 = vst [vmem:[#allocation8 + $0x568] sm:$0xff] %v2270
    %3113 = vst [vmem:[#allocation8 + $0x570] sm:$0xff] %v2341
    %3114 = vst [vmem:[#allocation8 + $0x578] sm:$0xff] %v2343
    %3115 = vst [vmem:[#allocation8 + $0x580] sm:$0xff] %v2414
    %3116 = vst [vmem:[#allocation8 + $0x588] sm:$0xff] %v2416
    %3117 = vst [vmem:[#allocation8 + $0x590] sm:$0xff] %v2487
    %3118 = vst [vmem:[#allocation8 + $0x598] sm:$0xff] %v2489
    %3119 = vst [vmem:[#allocation8 + $0x5a0] sm:$0xff] %v2560
    %3120 = vst [vmem:[#allocation8 + $0x5a8] sm:$0xff] %v2562
    %3121 = vst [vmem:[#allocation8 + $0x5b0] sm:$0xff] %v2633
    %3122 = vst [vmem:[#allocation8 + $0x5b8] sm:$0xff] %v2635
    %3123 = vst [vmem:[#allocation8 + $0x5c0] sm:$0xff] %v2706
    %3124 = vst [vmem:[#allocation8 + $0x5c8] sm:$0xff] %v2708
    %3125 = vst [vmem:[#allocation8 + $0x5d0] sm:$0xff] %v2779
    %3126 = vst [vmem:[#allocation8 + $0x5d8] sm:$0xff] %v2781
    %3127 = vst [vmem:[#allocation8 + $0x5e0] sm:$0xff] %v2852
    %3128 = vst [vmem:[#allocation8 + $0x5e8] sm:$0xff] %v2854
    %3129 = vst [vmem:[#allocation8 + $0x5f0] sm:$0xff] %v2925
    %3130 = vst [vmem:[#allocation8 + $0x5f8] sm:$0xff] %v2927
    %3131 = vst [vmem:[#allocation8 + $0x600] sm:$0xff] %v1836
    %3132 = vst [vmem:[#allocation8 + $0x608] sm:$0xff] %v1838
    %3133 = vst [vmem:[#allocation8 + $0x610] sm:$0xff] %v1909
    %3134 = vst [vmem:[#allocation8 + $0x618] sm:$0xff] %v1911
    %3135 = vst [vmem:[#allocation8 + $0x620] sm:$0xff] %v1982
    %3136 = vst [vmem:[#allocation8 + $0x628] sm:$0xff] %v1984
    %3137 = vst [vmem:[#allocation8 + $0x630] sm:$0xff] %v2055
    %3138 = vst [vmem:[#allocation8 + $0x638] sm:$0xff] %v2057
    %3139 = vst [vmem:[#allocation8 + $0x640] sm:$0xff] %v2128
    %3140 = vst [vmem:[#allocation8 + $0x648] sm:$0xff] %v2130
    %3141 = vst [vmem:[#allocation8 + $0x650] sm:$0xff] %v2201
    %3142 = vst [vmem:[#allocation8 + $0x658] sm:$0xff] %v2203
    %3143 = vst [vmem:[#allocation8 + $0x660] sm:$0xff] %v2274
    %3144 = vst [vmem:[#allocation8 + $0x668] sm:$0xff] %v2276
    %3145 = vst [vmem:[#allocation8 + $0x670] sm:$0xff] %v2347
    %3146 = vst [vmem:[#allocation8 + $0x678] sm:$0xff] %v2349
    %3147 = vst [vmem:[#allocation8 + $0x680] sm:$0xff] %v2420
    %3148 = vst [vmem:[#allocation8 + $0x688] sm:$0xff] %v2422
    %3149 = vst [vmem:[#allocation8 + $0x690] sm:$0xff] %v2493
    %3150 = vst [vmem:[#allocation8 + $0x698] sm:$0xff] %v2495
    %3151 = vst [vmem:[#allocation8 + $0x6a0] sm:$0xff] %v2566
    %3152 = vst [vmem:[#allocation8 + $0x6a8] sm:$0xff] %v2568
    %3153 = vst [vmem:[#allocation8 + $0x6b0] sm:$0xff] %v2639
    %3154 = vst [vmem:[#allocation8 + $0x6b8] sm:$0xff] %v2641
    %3155 = vst [vmem:[#allocation8 + $0x6c0] sm:$0xff] %v2712
    %3156 = vst [vmem:[#allocation8 + $0x6c8] sm:$0xff] %v2714
    %3157 = vst [vmem:[#allocation8 + $0x6d0] sm:$0xff] %v2785
    %3158 = vst [vmem:[#allocation8 + $0x6d8] sm:$0xff] %v2787
    %3159 = vst [vmem:[#allocation8 + $0x6e0] sm:$0xff] %v2858
    %3160 = vst [vmem:[#allocation8 + $0x6e8] sm:$0xff] %v2860
    %3161 = vst [vmem:[#allocation8 + $0x6f0] sm:$0xff] %v2931
    %3162 = vst [vmem:[#allocation8 + $0x6f8] sm:$0xff] %v2933
    %3163 = vst [vmem:[#allocation8 + $0x700] sm:$0xff] %v1840
    %3164 = vst [vmem:[#allocation8 + $0x708] sm:$0xff] %v1842
    %3165 = vst [vmem:[#allocation8 + $0x710] sm:$0xff] %v1913
    %3166 = vst [vmem:[#allocation8 + $0x718] sm:$0xff] %v1915
    %3167 = vst [vmem:[#allocation8 + $0x720] sm:$0xff] %v1986
    %3168 = vst [vmem:[#allocation8 + $0x728] sm:$0xff] %v1988
    %3169 = vst [vmem:[#allocation8 + $0x730] sm:$0xff] %v2059
    %3170 = vst [vmem:[#allocation8 + $0x738] sm:$0xff] %v2061
    %3171 = vst [vmem:[#allocation8 + $0x740] sm:$0xff] %v2132
    %3172 = vst [vmem:[#allocation8 + $0x748] sm:$0xff] %v2134
    %3173 = vst [vmem:[#allocation8 + $0x750] sm:$0xff] %v2205
    %3174 = vst [vmem:[#allocation8 + $0x758] sm:$0xff] %v2207
    %3175 = vst [vmem:[#allocation8 + $0x760] sm:$0xff] %v2278
    %3176 = vst [vmem:[#allocation8 + $0x768] sm:$0xff] %v2280
    %3177 = vst [vmem:[#allocation8 + $0x770] sm:$0xff] %v2351
    %3178 = vst [vmem:[#allocation8 + $0x778] sm:$0xff] %v2353
    %3179 = vst [vmem:[#allocation8 + $0x780] sm:$0xff] %v2424
    %3180 = vst [vmem:[#allocation8 + $0x788] sm:$0xff] %v2426
    %3181 = vst [vmem:[#allocation8 + $0x790] sm:$0xff] %v2497
    %3182 = vst [vmem:[#allocation8 + $0x798] sm:$0xff] %v2499
    %3183 = vst [vmem:[#allocation8 + $0x7a0] sm:$0xff] %v2570
    %3184 = vst [vmem:[#allocation8 + $0x7a8] sm:$0xff] %v2572
    %3185 = vst [vmem:[#allocation8 + $0x7b0] sm:$0xff] %v2643
    %3186 = vst [vmem:[#allocation8 + $0x7b8] sm:$0xff] %v2645
    %3187 = vst [vmem:[#allocation8 + $0x7c0] sm:$0xff] %v2716
    %3188 = vst [vmem:[#allocation8 + $0x7c8] sm:$0xff] %v2718
    %3189 = vst [vmem:[#allocation8 + $0x7d0] sm:$0xff] %v2789
    %3190 = vst [vmem:[#allocation8 + $0x7d8] sm:$0xff] %v2791
    %3191 = vst [vmem:[#allocation8 + $0x7e0] sm:$0xff] %v2862
    %3192 = vst [vmem:[#allocation8 + $0x7e8] sm:$0xff] %v2864
    %3193 = vst [vmem:[#allocation8 + $0x7f0] sm:$0xff] %v2935
    %3194 = vst [vmem:[#allocation8 + $0x7f8] sm:$0xff] %v2937
    // Predicated region
    $region26: #{tpu_custom_call.1} parent=1 // pred_check
      _
    $region27: #{tpu_custom_call.1} parent=1 // pred_check_branch
      %3196 = sbr.rel (0) target = $region29
    $region28: #{tpu_custom_call.1} parent=1 // pred_region
      %s3198 = ssub.s32 32768, 32768
      %3199 = vsyncadd [#allocation4], %s3198
      %s3200 = sshll.u32 [#allocation8], 4
      %s3201 = int_to_ptr.vmem [resolvable:$true] %s3200
      %3206 = dma.vmem_to_hbm [thread:$0]  %s3201, 32768, %s3, [#allocation4], 4096, 4096, 256
    $region29: #{tpu_custom_call.1} parent=1 // pred_fallthru
      _
    // Predicated region
    $region30: #{tpu_custom_call.1} parent=1 // pred_check
      _
    $region31: #{tpu_custom_call.1} parent=1 // pred_check_branch
      %3208 = sbr.rel (0) target = $region33
    $region32: #{tpu_custom_call.1} parent=1 // pred_region
      %3209 = dma.done [#allocation4], 32768
    $region33: #{tpu_custom_call.1} parent=1 // pred_fallthru
      _
    %3210 = vsyncpa [#allocation3], 1
    %3211 = vsyncpa [#allocation6], 1
    %3212 = vsyncpa [#allocation4], 1

</llo_original>
